<compile_context>
chip_gen: v6e
topology: v6e:2x2x1
jax: 0.10.0
libtpu: 0.0.40
codegen_flags: <defaults>
</compile_context>

<pallas_src>
import functools

import jax
import jax.numpy as jnp
import numpy as np
from jax.experimental import pallas as pl
from jax.experimental.pallas import tpu as pltpu

NEG_FILL = -1.0e30          # large finite negative (padding bias / winner mask)
IDX_PAD = 128               # lane-dense width of the top-k value/index outputs
_FALLBACK_VMEM_CAP = 64 * 1024 * 1024   # assume v7x-sized VMEM if query fails


def _round_up(x, m):
    return ((x + m - 1) // m) * m


def _pad_to(a, shape):
    return jnp.pad(a, [(0, s - d) for d, s in zip(a.shape, shape)])


def _pick_tile(n, preferred, unit):
    """Largest divisor of n that is <= preferred and a multiple of `unit`
    (or n itself, which satisfies the full-dim BlockSpec rule)."""
    if n % preferred == 0 and preferred % unit == 0:
        return preferred
    for t in range(min(n, preferred), 0, -1):
        if n % t == 0 and (t % unit == 0 or t == n):
            return t
    return n


def _vmem_budget_bytes():
    """Per-generation VMEM budget (~3/4 of physical: ~96 MiB v5e/v6e, ~48 MiB v7x)."""
    try:
        cap = int(pltpu.get_tpu_info().vmem_capacity_bytes)
    except Exception:
        cap = _FALLBACK_VMEM_CAP
    return max(32 * 1024 * 1024, (cap * 3) // 4)


# ----------------------------------------------------------------------------
# Kernels
# ----------------------------------------------------------------------------
def encode_topk_kernel(k, l_true, x_ref, wenc_ref, bias_ref,
                       logits_ref, vals_ref, idx_ref):
    """One (stream, batch-tile, latent-tile) grid step.

    x_ref      [bt, d_pad]   bf16
    wenc_ref   [d_pad, lt]   bf16   (latent tile of W_enc^T)
    bias_ref   [1, lt]       f32    (lat_b - pre_b @ W_enc^T; padded cols NEG_FILL)
    logits_ref [bt, lt]      f32    (written every step)
    vals_ref   [bt, IDX_PAD] f32    (running top-k values; resident across l)
    idx_ref    [bt, IDX_PAD] i32    (running top-k global latent indices)
    """
    l = pl.program_id(2)

    @pl.when(l == 0)
    def _():
        vals_ref[...] = jnp.full_like(vals_ref, NEG_FILL)
        idx_ref[...] = jnp.zeros_like(idx_ref)

    logits = jnp.dot(x_ref[...], wenc_ref[...],
                     preferred_element_type=jnp.float32) + bias_ref[...]
    logits_ref[...] = logits

    bt, lt = logits.shape
    kp = vals_ref.shape[-1]
    col = jax.lax.broadcasted_iota(jnp.int32, (bt, lt), 1) + l * lt   # global idx
    SENT = jnp.int32(2 ** 30)

    tile_v, tile_i = logits, col
    run_v, run_i = vals_ref[...], idx_ref[...]
    new_v = jnp.full((bt, kp), NEG_FILL, jnp.float32)
    new_i = jnp.zeros((bt, kp), jnp.int32)
    out_col = jax.lax.broadcasted_iota(jnp.int32, (bt, kp), 1)

    # Iterative merge of the running top-k with this latent tile.  k is small
    # and static -> unrolled Python loop.
    # TODO(synk): packing (monotone-int32(value), index) into one sortable key
    # would cut the cross-lane reduces per iteration from 2 to 1 (XLU has only
    # 2 ports on v6e/v7x); an exact pack needs >32 bits so it is skipped here.
    for i in range(k):
        m_t = jnp.max(tile_v, axis=-1, keepdims=True)
        m_r = jnp.max(run_v, axis=-1, keepdims=True)
        m = jnp.maximum(m_t, m_r)
        hit_t = tile_v == m
        hit_r = run_v == m
        win = jnp.minimum(
            jnp.min(jnp.where(hit_t, tile_i, SENT), axis=-1, keepdims=True),
            jnp.min(jnp.where(hit_r, run_i, SENT), axis=-1, keepdims=True))
        win = jnp.minimum(win, l_true - 1)          # NaN / degenerate-row guard
        tile_v = jnp.where(jnp.logical_and(hit_t, tile_i == win), NEG_FILL, tile_v)
        run_v = jnp.where(jnp.logical_and(hit_r, run_i == win), NEG_FILL, run_v)
        new_v = jnp.where(out_col == i, m, new_v)
        new_i = jnp.where(out_col == i, win, new_i)

    vals_ref[...] = new_v
    idx_ref[...] = new_i


def decode_full_kernel(codes_ref, wdec_ref, pre_b_ref, out_ref):
    """recon[s, t] = codes[s] @ W_dec[t]^T + pre_b[t]; W_dec fully resident."""
    out_ref[...] = (jnp.dot(codes_ref[...], wdec_ref[...],
                            preferred_element_type=jnp.float32)
                    + pre_b_ref[...]).astype(out_ref.dtype)


def decode_ltiled_kernel(codes_ref, wdec_ref, pre_b_ref, out_ref, acc_ref):
    """Same as above with an L-reduction grid axis (innermost, 'arbitrary')."""
    l = pl.program_id(3)

    @pl.when(l == 0)
    def _():
        acc_ref[...] = jnp.zeros_like(acc_ref)

    acc_ref[...] += jnp.dot(codes_ref[...], wdec_ref[...],
                            preferred_element_type=jnp.float32)

    @pl.when(l == pl.num_programs(3) - 1)
    def _():
        out_ref[...] = (acc_ref[...] + pre_b_ref[...]).astype(out_ref.dtype)


# ----------------------------------------------------------------------------
# Wrappers (gridded pallas_calls)
# ----------------------------------------------------------------------------
def encode_topk(x_stack, wenc_stack, bias_stack, k, l_true, b_tile, l_tile,
                vmem_limit):
    """x [S,B,d_pad] bf16, W_enc^T [S,d_pad,L_pad] bf16, bias [S,1,L_pad] f32."""
    S, B, d_pad = x_stack.shape
    L_pad = wenc_stack.shape[-1]
    assert B % b_tile == 0 and L_pad % l_tile == 0
    nb, nl = B // b_tile, L_pad // l_tile
    kernel = functools.partial(encode_topk_kernel, k, l_true)

    flops = 2 * S * B * d_pad * L_pad
    bytes_accessed = int(S * B * d_pad * 2 + S * nb * d_pad * L_pad * 2
                         + S * nb * L_pad * 4 + S * B * L_pad * 4
                         + 2 * S * B * IDX_PAD * 8)

    return pl.pallas_call(
        kernel,
        out_shape=(
            jax.ShapeDtypeStruct((S, B, L_pad), jnp.float32),     # logits
            jax.ShapeDtypeStruct((S, B, IDX_PAD), jnp.float32),   # top-k values
            jax.ShapeDtypeStruct((S, B, IDX_PAD), jnp.int32),     # top-k indices
        ),
        grid=(S, nb, nl),
        in_specs=[
            pl.BlockSpec((None, b_tile, d_pad), lambda s, b, l: (s, b, 0)),
            pl.BlockSpec((None, d_pad, l_tile), lambda s, b, l: (s, 0, l)),
            pl.BlockSpec((None, 1, l_tile), lambda s, b, l: (s, 0, l)),
        ],
        out_specs=(
            pl.BlockSpec((None, b_tile, l_tile), lambda s, b, l: (s, b, l)),
            pl.BlockSpec((None, b_tile, IDX_PAD), lambda s, b, l: (s, b, 0)),
            pl.BlockSpec((None, b_tile, IDX_PAD), lambda s, b, l: (s, b, 0)),
        ),
        compiler_params=pltpu.CompilerParams(
            dimension_semantics=("parallel", "parallel", "arbitrary"),
            vmem_limit_bytes=vmem_limit),
        cost_estimate=pl.CostEstimate(flops=int(flops), transcendentals=0,
                                      bytes_accessed=bytes_accessed),
    )(x_stack, wenc_stack, bias_stack)


def decode_all(codes_bf16, wdec_stack, pre_b_stack, b_tile, l_tile, vmem_limit):
    """Fused self + cross decodes: out[s, t] = codes[s] @ W_dec[t]^T + pre_b[t].

    codes_bf16 [S,B,L_pad] bf16, wdec_stack [S,L_pad,d_pad] bf16,
    pre_b_stack [S,1,d_pad] f32  ->  [S,S,B,d_pad] bf16.
    """
    S, B, L_pad = codes_bf16.shape
    d_pad = wdec_stack.shape[-1]
    assert B % b_tile == 0 and L_pad % l_tile == 0
    nb, nl = B // b_tile, L_pad // l_tile

    flops = 2 * S * S * B * L_pad * d_pad
    out_shape = jax.ShapeDtypeStruct((S, S, B, d_pad), jnp.bfloat16)

    # TODO(synk): k-sparse decode (gather the k selected W_dec rows per sample
    # via scalar-prefetched indices) would cut decoder FLOPs / weight reads by
    # ~L/k; dense kept because use_sparse_decoder=False is the module default.
    if nl == 1:
        # W_dec[t] fully resident across batch tiles: grid order (src, tgt, b),
        # weight block index depends only on tgt -> DMA'd once per (src, tgt)
        # pair instead of once per batch tile.
        bytes_accessed = int(S * S * B * L_pad * 2 + S * S * L_pad * d_pad * 2
                             + S * S * B * d_pad * 2 + S * d_pad * 4)
        return pl.pallas_call(
            decode_full_kernel,
            out_shape=out_shape,
            grid=(S, S, nb),
            in_specs=[
                pl.BlockSpec((None, b_tile, L_pad), lambda s, t, b: (s, b, 0)),
                # TODO(synk): pipeline_mode=pl.Buffered(1) on this spec would
                # halve the resident-weight VMEM (block index depends only on t).
                pl.BlockSpec((None, L_pad, d_pad), lambda s, t, b: (t, 0, 0)),
                pl.BlockSpec((None, 1, d_pad), lambda s, t, b: (t, 0, 0)),
            ],
            out_specs=pl.BlockSpec((None, None, b_tile, d_pad),
                                   lambda s, t, b: (s, t, b, 0)),
            compiler_params=pltpu.CompilerParams(
                dimension_semantics=("parallel", "parallel", "parallel"),
                vmem_limit_bytes=vmem_limit),
            cost_estimate=pl.CostEstimate(flops=int(flops), transcendentals=0,
                                          bytes_accessed=bytes_accessed),
        )(codes_bf16, wdec_stack, pre_b_stack)

    # Fallback for W_dec too large for VMEM: L-reduction axis with f32 VMEM
    # accumulator; bf16 writeback only on the last reduction step.
    # TODO(synk): this ordering re-streams W_dec tiles once per batch tile; a
    # hand-rolled emit_pipeline with weight residency would remove that.
    bytes_accessed = int(S * S * B * L_pad * 2 + S * S * nb * L_pad * d_pad * 2
                         + S * S * B * d_pad * 2 + S * d_pad * 4)
    return pl.pallas_call(
        decode_ltiled_kernel,
        out_shape=out_shape,
        grid=(S, S, nb, nl),
        in_specs=[
            pl.BlockSpec((None, b_tile, l_tile), lambda s, t, b, l: (s, b, l)),
            pl.BlockSpec((None, l_tile, d_pad), lambda s, t, b, l: (t, l, 0)),
            pl.BlockSpec((None, 1, d_pad), lambda s, t, b, l: (t, 0, 0)),
        ],
        out_specs=pl.BlockSpec((None, None, b_tile, d_pad),
                               lambda s, t, b, l: (s, t, b, 0)),
        scratch_shapes=[pltpu.VMEM((b_tile, d_pad), jnp.float32)],
        compiler_params=pltpu.CompilerParams(
            dimension_semantics=("parallel", "parallel", "parallel", "arbitrary"),
            vmem_limit_bytes=vmem_limit),
        cost_estimate=pl.CostEstimate(flops=int(flops), transcendentals=0,
                                      bytes_accessed=bytes_accessed),
    )(codes_bf16, wdec_stack, pre_b_stack)


# ----------------------------------------------------------------------------
# Model (parameter setup + dict plumbing in plain JAX; hot path in Pallas)
# ----------------------------------------------------------------------------
class MultiStreamSAE:
    def __init__(self, d_streams, n_latents, k, auxk=None,
                 auxk_threshold=1e-3, dead_steps_threshold=1000, seed=0):
        assert auxk is None  # TODO(synk): AuxK branch not implemented (auxk=None default)
        assert 1 <= k <= min(n_latents, IDX_PAD)
        self.streams = list(d_streams.keys())
        self.d_streams = dict(d_streams)
        self.n_latents = n_latents
        self.k = k
        self.auxk_threshold = auxk_threshold
        self.dead_steps_threshold = dead_steps_threshold

        # pad feature/latent dims to 128 lanes; one common d_pad for all streams
        self.d_pad = _round_up(max(d_streams.values()), 128)
        self.l_pad = _round_up(n_latents, 128)

        key = jax.random.PRNGKey(seed)
        self.params = {}
        self.stats = {}
        wenc_list, wdec_list, bias_list, pre_b_list = [], [], [], []
        for name, d_in in d_streams.items():
            key, sub = jax.random.split(key)
            bound = 1.0 / np.sqrt(d_in)
            w_enc = jax.random.uniform(sub, (n_latents, d_in), jnp.float32,
                                       -bound, bound)          # [L, d_in]
            w_dec = w_enc.T                                    # [d_in, L]
            # unit_norm_decoder_: unit-norm each latent's decoder direction
            w_dec = w_dec / jnp.linalg.norm(w_dec, axis=0, keepdims=True)
            pre_b = jnp.zeros((d_in,), jnp.float32)
            lat_b = jnp.zeros((n_latents,), jnp.float32)
            w_enc_t = w_enc.T                                  # [d_in, L]
            w_dec_t = w_dec.T                                  # [L, d_in]
            self.params[name] = dict(w_enc_t=w_enc_t, w_dec_t=w_dec_t,
                                     pre_b=pre_b, lat_b=lat_b)
            # TODO(synk): torch buffer is int64; int32 used here.
            self.stats[name] = jnp.zeros((n_latents,), jnp.int32)

            # fold pre_b into the latent bias (exact in f32; pre_b == 0 at init);
            # pad latent columns with NEG_FILL so they never win the top-k.
            lat_b_eff = lat_b - pre_b @ w_enc_t
            bias_pad = jnp.full((self.l_pad,), NEG_FILL, jnp.float32)
            bias_pad = bias_pad.at[:n_latents].set(lat_b_eff)
            wenc_list.append(_pad_to(w_enc_t.astype(jnp.bfloat16),
                                     (self.d_pad, self.l_pad)))
            wdec_list.append(_pad_to(w_dec_t.astype(jnp.bfloat16),
                                     (self.l_pad, self.d_pad)))
            bias_list.append(bias_pad)
            pre_b_list.append(_pad_to(pre_b, (self.d_pad,)))

        # stacked, padded, bf16 weights for the fused multi-stream kernels
        self.wenc_stack = jnp.stack(wenc_list)                 # [S, d_pad, L_pad] bf16
        self.wdec_stack = jnp.stack(wdec_list)                 # [S, L_pad, d_pad] bf16
        self.bias_stack = jnp.stack(bias_list)[:, None, :]     # [S, 1, L_pad]  f32
        self.pre_b_stack = jnp.stack(pre_b_list)[:, None, :]   # [S, 1, d_pad]  f32

    # -- per-generation tile / VMEM planning ---------------------------------
    def _plan_tiles(self, B, b_tile=None, enc_l_tile=None, dec_l_tile=None):
        budget = _vmem_budget_bytes()
        d, Lp = self.d_pad, self.l_pad

        if b_tile is None:
            b_tile = _pick_tile(B, preferred=512, unit=16)   # bf16 sublane packing

        def enc_need(bt, lt):
            return (2 * bt * d * 2            # x (bf16, double-buffered)
                    + 2 * d * lt * 2          # W_enc tile
                    + 2 * 8 * lt * 4          # bias tile
                    + 2 * bt * lt * 4         # logits out block
                    + 4 * bt * IDX_PAD * 8)   # top-k value/index blocks

        def dec_need(bt, lt):
            return (2 * lt * d * 2 + 2 * bt * lt * 2 + 2 * bt * d * 2
                    + bt * d * 4 + 2 * 8 * d * 4)

        def fit_l(bt, need_fn):
            lt = Lp
            while lt > 128:
                if Lp % lt == 0 and need_fn(bt, lt) <= budget:
                    return lt
                lt -= 128
            return 128

        # if even the smallest latent tile does not fit, shrink the batch tile
        while (enc_need(b_tile, 128) > budget and b_tile > 16
               and b_tile % 2 == 0 and B % (b_tile // 2) == 0):
            b_tile //= 2

        if enc_l_tile is None:
            enc_l_tile = fit_l(b_tile, enc_need)
        if dec_l_tile is None:
            dec_l_tile = Lp if dec_need(b_tile, Lp) <= budget else fit_l(b_tile, dec_need)

        return b_tile, enc_l_tile, dec_l_tile, budget

    # -- forward --------------------------------------------------------------
    def forward(self, inputs, *, b_tile=None, enc_l_tile=None, dec_l_tile=None):
        S = len(self.streams)
        B = inputs[self.streams[0]].shape[0]
        L, k = self.n_latents, self.k

        b_tile, enc_l_tile, dec_l_tile, budget = self._plan_tiles(
            B, b_tile, enc_l_tile, dec_l_tile)

        # stack + pad all streams into one lane-dense [S, B, d_pad] bf16 tensor
        x_stack = jnp.stack([_pad_to(inputs[s], (B, self.d_pad))
                             for s in self.streams]).astype(jnp.bfloat16)

        # ---- fused per-stream encode + running top-k (one gridded launch) ---
        logits_p, vals_p, idx_p = encode_topk(
            x_stack, self.wenc_stack, self.bias_stack, k, L,
            b_tile, enc_l_tile, budget)

        idx = idx_p[:, :, :k]                               # [S, B, k] int32
        vals = jnp.maximum(vals_p[:, :, :k], 0.0)           # ReLU postact (f32)

        # Rebuild dense tensors from the k (value, index) pairs (no full-width
        # codes store in the kernel and no f32->bf16 round trip).
        s_ix = jnp.arange(S)[:, None, None]
        b_ix = jnp.arange(B)[None, :, None]
        codes_f32 = jnp.zeros((S, B, L), jnp.float32).at[s_ix, b_ix, idx].set(vals)
        codes_bf16 = jnp.zeros((S, B, self.l_pad), jnp.bfloat16).at[
            s_ix, b_ix, idx].set(vals.astype(jnp.bfloat16))
        mask = jnp.zeros((S, B, L), jnp.bool_).at[s_ix, b_ix, idx].set(True)

        # ---- fused self + cross reconstructions (one gridded launch) --------
        recon_all = decode_all(codes_bf16, self.wdec_stack, self.pre_b_stack,
                               b_tile, dec_l_tile, budget)   # [S,S,B,d_pad] bf16

        outputs, new_stats = {}, {}
        total_sparsity = 0.0
        for si, s in enumerate(self.streams):
            d_in = self.d_streams[s]
            outputs[f"logits_{s}"] = logits_p[si, :, :L]
            outputs[f"sparse_codes_{s}"] = codes_f32[si]
            outputs[f"mask_{s}"] = mask[si]
            outputs[f"indices_{s}"] = idx[si]
            # recon kept in bf16 (halves decoder HBM writeback); upcast downstream.
            outputs[f"recon_{s}"] = recon_all[si, si, :, :d_in]
            # buffer side-effect of _encode_all_streams, done functionally:
            # activated latents reset to 0 then +1; others increment.
            activated = jnp.any(codes_f32[si] > self.auxk_threshold,
                                axis=0).astype(jnp.int32)
            new_stats[s] = self.stats[s] * (1 - activated) + 1
            total_sparsity = total_sparsity + mask[si].astype(jnp.float32).sum(-1).mean()

        n = float(S)
        outputs["avg_sparsity"] = total_sparsity / n
        outputs["avg_num_active_neurons"] = total_sparsity / n

        for si, src in enumerate(self.streams):
            for ti, tgt in enumerate(self.streams):
                if si == ti:
                    continue
                outputs[f"cross_recon_{tgt}_from_{src}"] = (
                    recon_all[si, ti, :, :self.d_streams[tgt]])
        return outputs, new_stats


# ----------------------------------------------------------------------------
# Pure-JAX reference (mirrors the kernel math: same bf16 casts / padding /
# bias folding) — correctness check only.
# ----------------------------------------------------------------------------
def reference_outputs(model, inputs):
    S = len(model.streams)
    B = inputs[model.streams[0]].shape[0]
    L, k = model.n_latents, model.k
    out, codes_bf16 = {}, {}
    for si, s in enumerate(model.streams):
        x_pad = _pad_to(inputs[s], (B, model.d_pad)).astype(jnp.bfloat16)
        logits_pad = jnp.dot(x_pad, model.wenc_stack[si],
                             preferred_element_type=jnp.float32) + model.bias_stack[si]
        logits = logits_pad[:, :L]
        vals, idxs = jax.lax.top_k(logits, k)
        vals = jnp.maximum(vals, 0.0)
        codes = jnp.zeros_like(logits).at[jnp.arange(B)[:, None], idxs].set(vals)
        codes_bf16[s] = jnp.zeros((B, model.l_pad), jnp.bfloat16).at[
            jnp.arange(B)[:, None], idxs].set(vals.astype(jnp.bfloat16))
        out[f"logits_{s}"] = logits
        out[f"sparse_codes_{s}"] = codes
        out[f"indices_{s}"] = idxs
    for si, src in enumerate(model.streams):
        for ti, tgt in enumerate(model.streams):
            recon_pad = (jnp.dot(codes_bf16[src], model.wdec_stack[ti],
                                 preferred_element_type=jnp.float32)
                         + model.pre_b_stack[ti]).astype(jnp.bfloat16)
            key = f"recon_{tgt}" if si == ti else f"cross_recon_{tgt}_from_{src}"
            out[key] = recon_pad[:, :model.d_streams[tgt]]
    return out


def _np32(a):
    return np.asarray(jnp.asarray(a, jnp.float32))


if __name__ == "__main__":
    B = 8
    d_streams = {"text": 32, "audio": 48}
    n_latents = 256
    k = 4

    model = MultiStreamSAE(d_streams, n_latents, k, seed=0)

    key = jax.random.PRNGKey(0)
    inputs = {}
    for name, d_in in d_streams.items():
        key, sub = jax.random.split(key)
        inputs[name] = jax.random.normal(sub, (B, d_in), jnp.float32)

    ref = reference_outputs(model, inputs)
    jax.block_until_ready(ref)

    def check(outputs):
        rtol = atol = 2e-2
        for s in model.streams:
            np.testing.assert_allclose(_np32(outputs[f"logits_{s}"]),
                                       _np32(ref[f"logits_{s}"]), rtol=rtol, atol=atol)
            np.testing.assert_allclose(_np32(outputs[f"sparse_codes_{s}"]),
                                       _np32(ref[f"sparse_codes_{s}"]), rtol=rtol, atol=atol)
            np.testing.assert_allclose(_np32(outputs[f"recon_{s}"]),
                                       _np32(ref[f"recon_{s}"]), rtol=rtol, atol=atol)
            np.testing.assert_array_equal(
                np.sort(np.asarray(outputs[f"indices_{s}"]), axis=-1),
                np.sort(np.asarray(ref[f"indices_{s}"]), axis=-1))
            assert int(np.asarray(outputs[f"mask_{s}"]).sum()) == B * k
        for src in model.streams:
            for tgt in model.streams:
                if src == tgt:
                    continue
                kk = f"cross_recon_{tgt}_from_{src}"
                np.testing.assert_allclose(_np32(outputs[kk]), _np32(ref[kk]),
                                           rtol=rtol, atol=atol)
        assert abs(float(outputs["avg_sparsity"]) - k) < 1e-5

    # Path 1: auto-planned tiles (single-pass encoder, fully resident W_dec).
    out1, stats1 = model.forward(inputs)
    jax.block_until_ready(out1)
    check(out1)

    # Path 2: force latent tiling to exercise the running-top-k merge and the
    # L-reduction decoder (the large-L / v7x code path).
    out2, stats2 = model.forward(inputs, enc_l_tile=128, dec_l_tile=128)
    jax.block_until_ready(out2)
    check(out2)

    print("KERNEL_OK")
</pallas_src>

<mosaic_0001>
module attributes {stable_mosaic.version = 11 : i64} {
  func.func @encode_topk_kernel(%arg0: i32, %arg1: i32, %arg2: i32, %arg3: memref<1x8x128xbf16, #tpu.memory_space<vmem>>, %arg4: memref<1x128x256xbf16, #tpu.memory_space<vmem>>, %arg5: memref<1x1x256xf32, #tpu.memory_space<vmem>>, %arg6: memref<1x8x256xf32, #tpu.memory_space<vmem>>, %arg7: memref<1x8x128xf32, #tpu.memory_space<vmem>>, %arg8: memref<1x8x128xi32, #tpu.memory_space<vmem>>) attributes {dimension_semantics = [#tpu.dimension_semantics<parallel>, #tpu.dimension_semantics<parallel>, #tpu.dimension_semantics<arbitrary>], iteration_bounds = array<i64: 2, 1, 1>, scalar_prefetch = 0 : i64, scratch_operands = 0 : i64, tpu.core_type = #tpu.core_type<tc>, window_params = [{transform_indices = @transform_0, window_bounds = array<i64: 1, 8, 128>}, {transform_indices = @transform_1, window_bounds = array<i64: 1, 128, 256>}, {transform_indices = @transform_2, window_bounds = array<i64: 1, 1, 256>}, {transform_indices = @transform_3, window_bounds = array<i64: 1, 8, 256>}, {transform_indices = @transform_4, window_bounds = array<i64: 1, 8, 128>}, {transform_indices = @transform_5, window_bounds = array<i64: 1, 8, 128>}]} {
    %c0_i32 = arith.constant 0 : i32
    %0 = arith.cmpi eq, %arg2, %c0_i32 : i32
    %1 = arith.extui %0 : i1 to i32
    %c0_i32_0 = arith.constant 0 : i32
    %2 = arith.cmpi ne, %1, %c0_i32_0 : i32
    scf.if %2 {
      %cst_63 = arith.constant -1.000000e+30 : f32
      %182 = vector.broadcast %cst_63 : f32 to vector<8x128xf32>
      %c0_64 = arith.constant 0 : index
      %c0_65 = arith.constant 0 : index
      %c0_66 = arith.constant 0 : index
      %183 = vector.load %arg7[%c0_64, %c0_65, %c0_66] : memref<1x8x128xf32, #tpu.memory_space<vmem>>, vector<1x8x128xf32>
      %184 = vector.shape_cast %183 : vector<1x8x128xf32> to vector<8x128xf32>
      %185 = vector.shape_cast %182 : vector<8x128xf32> to vector<1x8x128xf32>
      tpu.vector_store %arg7[%c0_64, %c0_65, %c0_66], %185 {strides = array<i32>} : memref<1x8x128xf32, #tpu.memory_space<vmem>>, vector<1x8x128xf32>,
      %c0_i32_67 = arith.constant 0 : i32
      %186 = vector.broadcast %c0_i32_67 : i32 to vector<8x128xi32>
      %c0_68 = arith.constant 0 : index
      %c0_69 = arith.constant 0 : index
      %c0_70 = arith.constant 0 : index
      %187 = vector.load %arg8[%c0_68, %c0_69, %c0_70] : memref<1x8x128xi32, #tpu.memory_space<vmem>>, vector<1x8x128xi32>
      %188 = vector.shape_cast %187 : vector<1x8x128xi32> to vector<8x128xi32>
      %189 = vector.shape_cast %186 : vector<8x128xi32> to vector<1x8x128xi32>
      tpu.vector_store %arg8[%c0_68, %c0_69, %c0_70], %189 {strides = array<i32>} : memref<1x8x128xi32, #tpu.memory_space<vmem>>, vector<1x8x128xi32>,
    } else {
    }
    %c0 = arith.constant 0 : index
    %c0_1 = arith.constant 0 : index
    %c0_2 = arith.constant 0 : index
    %3 = vector.load %arg3[%c0, %c0_1, %c0_2] : memref<1x8x128xbf16, #tpu.memory_space<vmem>>, vector<1x8x128xbf16>
    %4 = vector.shape_cast %3 : vector<1x8x128xbf16> to vector<8x128xbf16>
    %c0_3 = arith.constant 0 : index
    %c0_4 = arith.constant 0 : index
    %c0_5 = arith.constant 0 : index
    %5 = vector.load %arg4[%c0_3, %c0_4, %c0_5] : memref<1x128x256xbf16, #tpu.memory_space<vmem>>, vector<1x128x256xbf16>
    %6 = vector.shape_cast %5 : vector<1x128x256xbf16> to vector<128x256xbf16>
    %cst = arith.constant dense<0.000000e+00> : vector<8x256xf32>
    %7 = tpu.matmul %4, %6, %cst {dimension_numbers = #tpu.dot_dimension_numbers<[1], [0], [0], [1], [0, 0, 1, 1], [], []>} : vector<8x128xbf16>, vector<128x256xbf16>, vector<8x256xf32> -> vector<8x256xf32>
    %c0_6 = arith.constant 0 : index
    %c0_7 = arith.constant 0 : index
    %c0_8 = arith.constant 0 : index
    %8 = vector.load %arg5[%c0_6, %c0_7, %c0_8] : memref<1x1x256xf32, #tpu.memory_space<vmem>>, vector<1x1x256xf32>
    %9 = vector.shape_cast %8 : vector<1x1x256xf32> to vector<1x256xf32>
    %10 = vector.broadcast %9 : vector<1x256xf32> to vector<8x256xf32>
    %11 = arith.addf %7, %10 : vector<8x256xf32>
    %c0_9 = arith.constant 0 : index
    %c0_10 = arith.constant 0 : index
    %c0_11 = arith.constant 0 : index
    %12 = vector.load %arg6[%c0_9, %c0_10, %c0_11] : memref<1x8x256xf32, #tpu.memory_space<vmem>>, vector<1x8x256xf32>
    %13 = vector.shape_cast %12 : vector<1x8x256xf32> to vector<8x256xf32>
    %14 = vector.shape_cast %11 : vector<8x256xf32> to vector<1x8x256xf32>
    tpu.vector_store %arg6[%c0_9, %c0_10, %c0_11], %14 {strides = array<i32>} : memref<1x8x256xf32, #tpu.memory_space<vmem>>, vector<1x8x256xf32>,
    %15 = tpu.iota {dimensions = array<i32: 1>} : vector<8x256xi32>
    %c256_i32 = arith.constant 256 : i32
    %16 = arith.muli %arg2, %c256_i32 : i32
    %17 = vector.broadcast %16 : i32 to vector<8x256xi32>
    %18 = arith.addi %15, %17 : vector<8x256xi32>
    %c0_12 = arith.constant 0 : index
    %c0_13 = arith.constant 0 : index
    %c0_14 = arith.constant 0 : index
    %19 = vector.load %arg7[%c0_12, %c0_13, %c0_14] : memref<1x8x128xf32, #tpu.memory_space<vmem>>, vector<1x8x128xf32>
    %20 = vector.shape_cast %19 : vector<1x8x128xf32> to vector<8x128xf32>
    %c0_15 = arith.constant 0 : index
    %c0_16 = arith.constant 0 : index
    %c0_17 = arith.constant 0 : index
    %21 = vector.load %arg8[%c0_15, %c0_16, %c0_17] : memref<1x8x128xi32, #tpu.memory_space<vmem>>, vector<1x8x128xi32>
    %22 = vector.shape_cast %21 : vector<1x8x128xi32> to vector<8x128xi32>
    %cst_18 = arith.constant -1.000000e+30 : f32
    %23 = vector.broadcast %cst_18 : f32 to vector<8x128xf32>
    %c0_i32_19 = arith.constant 0 : i32
    %24 = vector.broadcast %c0_i32_19 : i32 to vector<8x128xi32>
    %25 = tpu.iota {dimensions = array<i32: 1>} : vector<8x128xi32>
    %cst_20 = arith.constant dense<0xFF800000> : vector<8xf32>
    %26 = vector.multi_reduction <maximumf>, %11, %cst_20 [1] : vector<8x256xf32> to vector<8xf32>
    %27 = vector.shape_cast %26 : vector<8xf32> to vector<8x1xf32>
    %cst_21 = arith.constant dense<0xFF800000> : vector<8xf32>
    %28 = vector.multi_reduction <maximumf>, %20, %cst_21 [1] : vector<8x128xf32> to vector<8xf32>
    %29 = vector.shape_cast %28 : vector<8xf32> to vector<8x1xf32>
    %30 = arith.maximumf %27, %29 : vector<8x1xf32>
    %31 = vector.broadcast %30 : vector<8x1xf32> to vector<8x256xf32>
    %32 = arith.cmpf oeq, %11, %31 : vector<8x256xf32>
    %33 = vector.broadcast %30 : vector<8x1xf32> to vector<8x128xf32>
    %34 = arith.cmpf oeq, %20, %33 : vector<8x128xf32>
    %c1073741824_i32 = arith.constant 1073741824 : i32
    %35 = vector.broadcast %c1073741824_i32 : i32 to vector<8x256xi32>
    %36 = arith.select %32, %18, %35 : vector<8x256xi1>, vector<8x256xi32>
    %cst_22 = arith.constant dense<2147483647> : vector<8xi32>
    %37 = vector.multi_reduction <minsi>, %36, %cst_22 [1] : vector<8x256xi32> to vector<8xi32>
    %38 = vector.shape_cast %37 : vector<8xi32> to vector<8x1xi32>
    %c1073741824_i32_23 = arith.constant 1073741824 : i32
    %39 = vector.broadcast %c1073741824_i32_23 : i32 to vector<8x128xi32>
    %40 = arith.select %34, %22, %39 : vector<8x128xi1>, vector<8x128xi32>
    %cst_24 = arith.constant dense<2147483647> : vector<8xi32>
    %41 = vector.multi_reduction <minsi>, %40, %cst_24 [1] : vector<8x128xi32> to vector<8xi32>
    %42 = vector.shape_cast %41 : vector<8xi32> to vector<8x1xi32>
    %43 = arith.minsi %38, %42 : vector<8x1xi32>
    %c255_i32 = arith.constant 255 : i32
    %44 = vector.broadcast %c255_i32 : i32 to vector<8x1xi32>
    %45 = arith.minsi %43, %44 : vector<8x1xi32>
    %46 = vector.broadcast %45 : vector<8x1xi32> to vector<8x256xi32>
    %47 = arith.cmpi eq, %18, %46 : vector<8x256xi32>
    %48 = arith.andi %32, %47 : vector<8x256xi1>
    %cst_25 = arith.constant -1.000000e+30 : f32
    %49 = vector.broadcast %cst_25 : f32 to vector<8x256xf32>
    %50 = arith.select %48, %49, %11 : vector<8x256xi1>, vector<8x256xf32>
    %51 = vector.broadcast %45 : vector<8x1xi32> to vector<8x128xi32>
    %52 = arith.cmpi eq, %22, %51 : vector<8x128xi32>
    %53 = arith.andi %34, %52 : vector<8x128xi1>
    %cst_26 = arith.constant -1.000000e+30 : f32
    %54 = vector.broadcast %cst_26 : f32 to vector<8x128xf32>
    %55 = arith.select %53, %54, %20 : vector<8x128xi1>, vector<8x128xf32>
    %c0_i32_27 = arith.constant 0 : i32
    %56 = vector.broadcast %c0_i32_27 : i32 to vector<8x128xi32>
    %57 = arith.cmpi eq, %25, %56 : vector<8x128xi32>
    %58 = vector.shape_cast %30 : vector<8x1xf32> to vector<8x1xf32>
    %59 = vector.broadcast %58 : vector<8x1xf32> to vector<8x128xf32>
    %60 = arith.select %57, %59, %23 : vector<8x128xi1>, vector<8x128xf32>
    %c0_i32_28 = arith.constant 0 : i32
    %61 = vector.broadcast %c0_i32_28 : i32 to vector<8x128xi32>
    %62 = arith.cmpi eq, %25, %61 : vector<8x128xi32>
    %63 = vector.shape_cast %45 : vector<8x1xi32> to vector<8x1xi32>
    %64 = vector.broadcast %63 : vector<8x1xi32> to vector<8x128xi32>
    %65 = arith.select %62, %64, %24 : vector<8x128xi1>, vector<8x128xi32>
    %cst_29 = arith.constant dense<0xFF800000> : vector<8xf32>
    %66 = vector.multi_reduction <maximumf>, %50, %cst_29 [1] : vector<8x256xf32> to vector<8xf32>
    %67 = vector.shape_cast %66 : vector<8xf32> to vector<8x1xf32>
    %cst_30 = arith.constant dense<0xFF800000> : vector<8xf32>
    %68 = vector.multi_reduction <maximumf>, %55, %cst_30 [1] : vector<8x128xf32> to vector<8xf32>
    %69 = vector.shape_cast %68 : vector<8xf32> to vector<8x1xf32>
    %70 = arith.maximumf %67, %69 : vector<8x1xf32>
    %71 = vector.broadcast %70 : vector<8x1xf32> to vector<8x256xf32>
    %72 = arith.cmpf oeq, %50, %71 : vector<8x256xf32>
    %73 = vector.broadcast %70 : vector<8x1xf32> to vector<8x128xf32>
    %74 = arith.cmpf oeq, %55, %73 : vector<8x128xf32>
    %c1073741824_i32_31 = arith.constant 1073741824 : i32
    %75 = vector.broadcast %c1073741824_i32_31 : i32 to vector<8x256xi32>
    %76 = arith.select %72, %18, %75 : vector<8x256xi1>, vector<8x256xi32>
    %cst_32 = arith.constant dense<2147483647> : vector<8xi32>
    %77 = vector.multi_reduction <minsi>, %76, %cst_32 [1] : vector<8x256xi32> to vector<8xi32>
    %78 = vector.shape_cast %77 : vector<8xi32> to vector<8x1xi32>
    %c1073741824_i32_33 = arith.constant 1073741824 : i32
    %79 = vector.broadcast %c1073741824_i32_33 : i32 to vector<8x128xi32>
    %80 = arith.select %74, %22, %79 : vector<8x128xi1>, vector<8x128xi32>
    %cst_34 = arith.constant dense<2147483647> : vector<8xi32>
    %81 = vector.multi_reduction <minsi>, %80, %cst_34 [1] : vector<8x128xi32> to vector<8xi32>
    %82 = vector.shape_cast %81 : vector<8xi32> to vector<8x1xi32>
    %83 = arith.minsi %78, %82 : vector<8x1xi32>
    %c255_i32_35 = arith.constant 255 : i32
    %84 = vector.broadcast %c255_i32_35 : i32 to vector<8x1xi32>
    %85 = arith.minsi %83, %84 : vector<8x1xi32>
    %86 = vector.broadcast %85 : vector<8x1xi32> to vector<8x256xi32>
    %87 = arith.cmpi eq, %18, %86 : vector<8x256xi32>
    %88 = arith.andi %72, %87 : vector<8x256xi1>
    %cst_36 = arith.constant -1.000000e+30 : f32
    %89 = vector.broadcast %cst_36 : f32 to vector<8x256xf32>
    %90 = arith.select %88, %89, %50 : vector<8x256xi1>, vector<8x256xf32>
    %91 = vector.broadcast %85 : vector<8x1xi32> to vector<8x128xi32>
    %92 = arith.cmpi eq, %22, %91 : vector<8x128xi32>
    %93 = arith.andi %74, %92 : vector<8x128xi1>
    %cst_37 = arith.constant -1.000000e+30 : f32
    %94 = vector.broadcast %cst_37 : f32 to vector<8x128xf32>
    %95 = arith.select %93, %94, %55 : vector<8x128xi1>, vector<8x128xf32>
    %c1_i32 = arith.constant 1 : i32
    %96 = vector.broadcast %c1_i32 : i32 to vector<8x128xi32>
    %97 = arith.cmpi eq, %25, %96 : vector<8x128xi32>
    %98 = vector.shape_cast %70 : vector<8x1xf32> to vector<8x1xf32>
    %99 = vector.broadcast %98 : vector<8x1xf32> to vector<8x128xf32>
    %100 = arith.select %97, %99, %60 : vector<8x128xi1>, vector<8x128xf32>
    %c1_i32_38 = arith.constant 1 : i32
    %101 = vector.broadcast %c1_i32_38 : i32 to vector<8x128xi32>
    %102 = arith.cmpi eq, %25, %101 : vector<8x128xi32>
    %103 = vector.shape_cast %85 : vector<8x1xi32> to vector<8x1xi32>
    %104 = vector.broadcast %103 : vector<8x1xi32> to vector<8x128xi32>
    %105 = arith.select %102, %104, %65 : vector<8x128xi1>, vector<8x128xi32>
    %cst_39 = arith.constant dense<0xFF800000> : vector<8xf32>
    %106 = vector.multi_reduction <maximumf>, %90, %cst_39 [1] : vector<8x256xf32> to vector<8xf32>
    %107 = vector.shape_cast %106 : vector<8xf32> to vector<8x1xf32>
    %cst_40 = arith.constant dense<0xFF800000> : vector<8xf32>
    %108 = vector.multi_reduction <maximumf>, %95, %cst_40 [1] : vector<8x128xf32> to vector<8xf32>
    %109 = vector.shape_cast %108 : vector<8xf32> to vector<8x1xf32>
    %110 = arith.maximumf %107, %109 : vector<8x1xf32>
    %111 = vector.broadcast %110 : vector<8x1xf32> to vector<8x256xf32>
    %112 = arith.cmpf oeq, %90, %111 : vector<8x256xf32>
    %113 = vector.broadcast %110 : vector<8x1xf32> to vector<8x128xf32>
    %114 = arith.cmpf oeq, %95, %113 : vector<8x128xf32>
    %c1073741824_i32_41 = arith.constant 1073741824 : i32
    %115 = vector.broadcast %c1073741824_i32_41 : i32 to vector<8x256xi32>
    %116 = arith.select %112, %18, %115 : vector<8x256xi1>, vector<8x256xi32>
    %cst_42 = arith.constant dense<2147483647> : vector<8xi32>
    %117 = vector.multi_reduction <minsi>, %116, %cst_42 [1] : vector<8x256xi32> to vector<8xi32>
    %118 = vector.shape_cast %117 : vector<8xi32> to vector<8x1xi32>
    %c1073741824_i32_43 = arith.constant 1073741824 : i32
    %119 = vector.broadcast %c1073741824_i32_43 : i32 to vector<8x128xi32>
    %120 = arith.select %114, %22, %119 : vector<8x128xi1>, vector<8x128xi32>
    %cst_44 = arith.constant dense<2147483647> : vector<8xi32>
    %121 = vector.multi_reduction <minsi>, %120, %cst_44 [1] : vector<8x128xi32> to vector<8xi32>
    %122 = vector.shape_cast %121 : vector<8xi32> to vector<8x1xi32>
    %123 = arith.minsi %118, %122 : vector<8x1xi32>
    %c255_i32_45 = arith.constant 255 : i32
    %124 = vector.broadcast %c255_i32_45 : i32 to vector<8x1xi32>
    %125 = arith.minsi %123, %124 : vector<8x1xi32>
    %126 = vector.broadcast %125 : vector<8x1xi32> to vector<8x256xi32>
    %127 = arith.cmpi eq, %18, %126 : vector<8x256xi32>
    %128 = arith.andi %112, %127 : vector<8x256xi1>
    %cst_46 = arith.constant -1.000000e+30 : f32
    %129 = vector.broadcast %cst_46 : f32 to vector<8x256xf32>
    %130 = arith.select %128, %129, %90 : vector<8x256xi1>, vector<8x256xf32>
    %131 = vector.broadcast %125 : vector<8x1xi32> to vector<8x128xi32>
    %132 = arith.cmpi eq, %22, %131 : vector<8x128xi32>
    %133 = arith.andi %114, %132 : vector<8x128xi1>
    %cst_47 = arith.constant -1.000000e+30 : f32
    %134 = vector.broadcast %cst_47 : f32 to vector<8x128xf32>
    %135 = arith.select %133, %134, %95 : vector<8x128xi1>, vector<8x128xf32>
    %c2_i32 = arith.constant 2 : i32
    %136 = vector.broadcast %c2_i32 : i32 to vector<8x128xi32>
    %137 = arith.cmpi eq, %25, %136 : vector<8x128xi32>
    %138 = vector.shape_cast %110 : vector<8x1xf32> to vector<8x1xf32>
    %139 = vector.broadcast %138 : vector<8x1xf32> to vector<8x128xf32>
    %140 = arith.select %137, %139, %100 : vector<8x128xi1>, vector<8x128xf32>
    %c2_i32_48 = arith.constant 2 : i32
    %141 = vector.broadcast %c2_i32_48 : i32 to vector<8x128xi32>
    %142 = arith.cmpi eq, %25, %141 : vector<8x128xi32>
    %143 = vector.shape_cast %125 : vector<8x1xi32> to vector<8x1xi32>
    %144 = vector.broadcast %143 : vector<8x1xi32> to vector<8x128xi32>
    %145 = arith.select %142, %144, %105 : vector<8x128xi1>, vector<8x128xi32>
    %cst_49 = arith.constant dense<0xFF800000> : vector<8xf32>
    %146 = vector.multi_reduction <maximumf>, %130, %cst_49 [1] : vector<8x256xf32> to vector<8xf32>
    %147 = vector.shape_cast %146 : vector<8xf32> to vector<8x1xf32>
    %cst_50 = arith.constant dense<0xFF800000> : vector<8xf32>
    %148 = vector.multi_reduction <maximumf>, %135, %cst_50 [1] : vector<8x128xf32> to vector<8xf32>
    %149 = vector.shape_cast %148 : vector<8xf32> to vector<8x1xf32>
    %150 = arith.maximumf %147, %149 : vector<8x1xf32>
    %151 = vector.broadcast %150 : vector<8x1xf32> to vector<8x256xf32>
    %152 = arith.cmpf oeq, %130, %151 : vector<8x256xf32>
    %153 = vector.broadcast %150 : vector<8x1xf32> to vector<8x128xf32>
    %154 = arith.cmpf oeq, %135, %153 : vector<8x128xf32>
    %c1073741824_i32_51 = arith.constant 1073741824 : i32
    %155 = vector.broadcast %c1073741824_i32_51 : i32 to vector<8x256xi32>
    %156 = arith.select %152, %18, %155 : vector<8x256xi1>, vector<8x256xi32>
    %cst_52 = arith.constant dense<2147483647> : vector<8xi32>
    %157 = vector.multi_reduction <minsi>, %156, %cst_52 [1] : vector<8x256xi32> to vector<8xi32>
    %158 = vector.shape_cast %157 : vector<8xi32> to vector<8x1xi32>
    %c1073741824_i32_53 = arith.constant 1073741824 : i32
    %159 = vector.broadcast %c1073741824_i32_53 : i32 to vector<8x128xi32>
    %160 = arith.select %154, %22, %159 : vector<8x128xi1>, vector<8x128xi32>
    %cst_54 = arith.constant dense<2147483647> : vector<8xi32>
    %161 = vector.multi_reduction <minsi>, %160, %cst_54 [1] : vector<8x128xi32> to vector<8xi32>
    %162 = vector.shape_cast %161 : vector<8xi32> to vector<8x1xi32>
    %163 = arith.minsi %158, %162 : vector<8x1xi32>
    %c255_i32_55 = arith.constant 255 : i32
    %164 = vector.broadcast %c255_i32_55 : i32 to vector<8x1xi32>
    %165 = arith.minsi %163, %164 : vector<8x1xi32>
    %c3_i32 = arith.constant 3 : i32
    %166 = vector.broadcast %c3_i32 : i32 to vector<8x128xi32>
    %167 = arith.cmpi eq, %25, %166 : vector<8x128xi32>
    %168 = vector.shape_cast %150 : vector<8x1xf32> to vector<8x1xf32>
    %169 = vector.broadcast %168 : vector<8x1xf32> to vector<8x128xf32>
    %170 = arith.select %167, %169, %140 : vector<8x128xi1>, vector<8x128xf32>
    %c3_i32_56 = arith.constant 3 : i32
    %171 = vector.broadcast %c3_i32_56 : i32 to vector<8x128xi32>
    %172 = arith.cmpi eq, %25, %171 : vector<8x128xi32>
    %173 = vector.shape_cast %165 : vector<8x1xi32> to vector<8x1xi32>
    %174 = vector.broadcast %173 : vector<8x1xi32> to vector<8x128xi32>
    %175 = arith.select %172, %174, %145 : vector<8x128xi1>, vector<8x128xi32>
    %c0_57 = arith.constant 0 : index
    %c0_58 = arith.constant 0 : index
    %c0_59 = arith.constant 0 : index
    %176 = vector.load %arg7[%c0_57, %c0_58, %c0_59] : memref<1x8x128xf32, #tpu.memory_space<vmem>>, vector<1x8x128xf32>
    %177 = vector.shape_cast %176 : vector<1x8x128xf32> to vector<8x128xf32>
    %178 = vector.shape_cast %170 : vector<8x128xf32> to vector<1x8x128xf32>
    tpu.vector_store %arg7[%c0_57, %c0_58, %c0_59], %178 {strides = array<i32>} : memref<1x8x128xf32, #tpu.memory_space<vmem>>, vector<1x8x128xf32>,
    %c0_60 = arith.constant 0 : index
    %c0_61 = arith.constant 0 : index
    %c0_62 = arith.constant 0 : index
    %179 = vector.load %arg8[%c0_60, %c0_61, %c0_62] : memref<1x8x128xi32, #tpu.memory_space<vmem>>, vector<1x8x128xi32>
    %180 = vector.shape_cast %179 : vector<1x8x128xi32> to vector<8x128xi32>
    %181 = vector.shape_cast %175 : vector<8x128xi32> to vector<1x8x128xi32>
    tpu.vector_store %arg8[%c0_60, %c0_61, %c0_62], %181 {strides = array<i32>} : memref<1x8x128xi32, #tpu.memory_space<vmem>>, vector<1x8x128xi32>,
    return
  }
  func.func @transform_0(%arg0: i32, %arg1: i32, %arg2: i32) -> (i32, i32, i32) {
    %c0_i32 = arith.constant 0 : i32
    %c0_i32_0 = arith.constant 0 : i32
    return %arg0, %arg1, %c0_i32 : i32, i32, i32
  }
  func.func @transform_1(%arg0: i32, %arg1: i32, %arg2: i32) -> (i32, i32, i32) {
    %c0_i32 = arith.constant 0 : i32
    %c0_i32_0 = arith.constant 0 : i32
    return %arg0, %c0_i32, %arg2 : i32, i32, i32
  }
  func.func @transform_2(%arg0: i32, %arg1: i32, %arg2: i32) -> (i32, i32, i32) {
    %c0_i32 = arith.constant 0 : i32
    %c0_i32_0 = arith.constant 0 : i32
    return %arg0, %c0_i32, %arg2 : i32, i32, i32
  }
  func.func @transform_3(%arg0: i32, %arg1: i32, %arg2: i32) -> (i32, i32, i32) {
    %c0_i32 = arith.constant 0 : i32
    return %arg0, %arg1, %arg2 : i32, i32, i32
  }
  func.func @transform_4(%arg0: i32, %arg1: i32, %arg2: i32) -> (i32, i32, i32) {
    %c0_i32 = arith.constant 0 : i32
    %c0_i32_0 = arith.constant 0 : i32
    return %arg0, %arg1, %c0_i32 : i32, i32, i32
  }
  func.func @transform_5(%arg0: i32, %arg1: i32, %arg2: i32) -> (i32, i32, i32) {
    %c0_i32 = arith.constant 0 : i32
    %c0_i32_0 = arith.constant 0 : i32
    return %arg0, %arg1, %c0_i32 : i32, i32, i32
  }
}

</mosaic_0001>

<llo_original>
// kernel: tpu_custom_call.1
$region0: #{tpu_custom_call.1}
  #allocation0 [shape = 'u32[]', space=smem, size = 0x4, offset = 0x4, fixed_abs, tag = 'smem constant byte address 0x4 - core index']
  #allocation1 [shape = 'u32[144,128]{1,0:T(1,128)}', space=vmem, size = 0x12000, scoped, tag = 'internal scratch']
  %s0 = inlined_call_operand.hbm [shape: bf16[2,8,128], index: 0, kind: input, shape index: {}]
  %s1 = inlined_call_operand.hbm [shape: bf16[2,128,256], index: 1, kind: input, shape index: {}]
  %s2 = inlined_call_operand.hbm [shape: f32[2,1,256], index: 2, kind: input, shape index: {}]
  %s3 = inlined_call_operand.hbm [shape: f32[2,8,256], index: 3, kind: output, shape index: {0}]
  %s4 = inlined_call_operand.hbm [shape: f32[2,8,128], index: 4, kind: output, shape index: {1}]
  %s5 = inlined_call_operand.hbm [shape: s32[2,8,128], index: 5, kind: output, shape index: {2}]
  %6 = xla_tuple %s3, %s4, %s5
  %s7 = sld [smem:[#allocation0]]
  $region77: #{tpu_custom_call.1} parent=0
    _
  %s9 = ssub.s32 1, %s7
  %s10 = scalar_select 0, %s9, %s7
  $region1: #{tpu_custom_call.1} parent=0
    #allocation2 [shape = 'u8[4096]{0}', space=vmem, size = 0x1000, scoped, tag = 'input window, operand 0']
    #allocation3 [shape = 's32[2]{0}', space=sflag, size = 0x8, scoped, tag = 'scoped memory for tpu_custom_call.1']
    #allocation4 [shape = 's32[2]{0}', space=sflag, size = 0x8, scoped, tag = 'scoped memory for tpu_custom_call.1']
    #allocation5 [shape = 'u8[131072]{0}', space=vmem, size = 0x20000, scoped, tag = 'input window, operand 1']
    #allocation6 [shape = 's32[2]{0}', space=sflag, size = 0x8, scoped, tag = 'scoped memory for tpu_custom_call.1']
    #allocation7 [shape = 'u8[2048]{0}', space=vmem, size = 0x800, scoped, tag = 'input window, operand 2']
    #allocation8 [shape = 'u8[16384]{0}', space=vmem, size = 0x4000, scoped, tag = 'output window, operand 0']
    #allocation9 [shape = 'u8[8192]{0}', space=vmem, size = 0x2000, scoped, tag = 'output window, operand 1']
    #allocation10 [shape = 's32[2]{0}', space=sflag, size = 0x8, scoped, tag = 'scoped memory for tpu_custom_call.1']
    #allocation11 [shape = 'u8[8192]{0}', space=vmem, size = 0x2000, scoped, tag = 'output window, operand 2']
    %11 = vsyncpa [#allocation3], 0
    %s12 = scalar_lea.sflag [#allocation3], 1
    %13 = vsyncpa %s12, 0
    %14 = vsyncpa [#allocation6], 0
    %s15 = scalar_lea.sflag [#allocation6], 1
    %16 = vsyncpa %s15, 0
    %17 = vsyncpa [#allocation4], 0
    %s18 = scalar_lea.sflag [#allocation4], 1
    %19 = vsyncpa %s18, 0
    %20 = vsyncpa [#allocation10], 0
    %s21 = scalar_lea.sflag [#allocation10], 1
    %22 = vsyncpa %s21, 0
    loop: start=0, step=1, limit=4
    $region2: #{tpu_custom_call.1} parent=1 // loop_pre_header
      _
    $region3: #{tpu_custom_call.1} parent=1 // loop_header
      %s24 = sphi 0, %s28
      %p25 = scmp.ge.s32.totalorder %s24, 4
      %s31 = sphi 0, %s50
      %s32 = sphi 0, %s46
      %s33 = sphi 0, %s42
      %s34 = sphi 0, %s31
      %s35 = sphi 0, %s32
      %s36 = sphi 0, %s33
      %s37 = sphi 0, %s34
      %s38 = sphi 0, %s35
      %s39 = sphi 0, %s36
      %s55 = sphi 0, %s57
      %s58 = sphi 0, %s55
      %s59 = sphi 0, %s58
      %s75 = sphi 0, %s59
      %s83 = sphi 0, %s85
      %s86 = sphi 0, %s83
      %s87 = sphi 0, %s86
      %s103 = sphi 0, %s87
      %s111 = sphi 0, %s113
      %s114 = sphi 0, %s111
      %s115 = sphi 0, %s114
      %s131 = sphi 0, %s115
      %s141 = sphi 0, %s143
      %s144 = sphi 0, %s141
      %s145 = sphi 0, %s144
      %s161 = sphi 0, %s145
      %s169 = sphi 0, %s171
      %s172 = sphi 0, %s169
      %s173 = sphi 0, %s172
      %s189 = sphi 0, %s173
      %s197 = sphi 0, %s199
      %s200 = sphi 0, %s197
      %s201 = sphi 0, %s200
      %s217 = sphi 0, %s201
    $region4: #{tpu_custom_call.1} parent=1 // loop_header_branch
      %27 = sbr.rel (%p25) target = $region8
    $region5: #{tpu_custom_call.1} parent=1 // loop_body
      %s29 = ssub.s32 %s24, 1
      %s30 = ssub.s32 %s24, 2
      %s40 = sadd.s32 1, %s33
      %p41 = scmp.ge.s32.totalorder %s40, 1
      %s42 = scalar_select %p41, 0, %s40
      %s43 = sadd.s32 1, %s32
      %s44 = scalar_select %p41, %s43, %s32
      %p45 = scmp.ge.s32.totalorder %s44, 1
      %s46 = scalar_select %p45, 0, %s44
      %s47 = sadd.s32 1, %s31
      %s48 = scalar_select %p45, %s47, %s31
      %p49 = scmp.ge.s32.totalorder %s48, 2
      %s50 = scalar_select %p49, 0, %s48
      %s51 = ssub.s32 %s31, %s50
      %s52 = ssub.s32 %s32, %s46
      %s53 = sor.u32 %s51, %s52
      %p54 = scmp.eq.s32.totalorder %s53, 0
      %s56 = sadd.s32 %s55, 1
      %s57 = scalar_select %p54, %s55, %s56
      %p60 = pneg %p54
      %p61 = scmp.eq.s32.totalorder %s24, 1
      %p62 = por %p60, %p61
      %p63 = scmp.ne.s32.totalorder %s55, %s58
      %p64 = scmp.eq.s32.totalorder %s24, 0
      %p65 = por %p63, %p64
      %p66 = scmp.ne.s32.totalorder %s55, %s58
      %p67 = scmp.eq.s32.totalorder %s29, 1
      %p68 = por %p66, %p67
      %p69 = scmp.ne.s32.totalorder %s58, %s59
      %p70 = scmp.eq.s32.totalorder %s29, 0
      %p71 = por %p69, %p70
      %p72 = scmp.ne.s32.totalorder %s58, %s59
      %p73 = scmp.eq.s32.totalorder %s30, 1
      %p74 = por %p72, %p73
      %p76 = scmp.ne.s32.totalorder %s59, %s75
      %p77 = scmp.eq.s32.totalorder %s30, 0
      %p78 = por %p76, %p77
      %s79 = ssub.s32 %s31, %s50
      %s80 = ssub.s32 %s33, %s42
      %s81 = sor.u32 %s79, %s80
      %p82 = scmp.eq.s32.totalorder %s81, 0
      %s84 = sadd.s32 %s83, 1
      %s85 = scalar_select %p82, %s83, %s84
      %p88 = pneg %p82
      %p89 = scmp.eq.s32.totalorder %s24, 1
      %p90 = por %p88, %p89
      %p91 = scmp.ne.s32.totalorder %s83, %s86
      %p92 = scmp.eq.s32.totalorder %s24, 0
      %p93 = por %p91, %p92
      %p94 = scmp.ne.s32.totalorder %s83, %s86
      %p95 = scmp.eq.s32.totalorder %s29, 1
      %p96 = por %p94, %p95
      %p97 = scmp.ne.s32.totalorder %s86, %s87
      %p98 = scmp.eq.s32.totalorder %s29, 0
      %p99 = por %p97, %p98
      %p100 = scmp.ne.s32.totalorder %s86, %s87
      %p101 = scmp.eq.s32.totalorder %s30, 1
      %p102 = por %p100, %p101
      %p104 = scmp.ne.s32.totalorder %s87, %s103
      %p105 = scmp.eq.s32.totalorder %s30, 0
      %p106 = por %p104, %p105
      %s107 = ssub.s32 %s31, %s50
      %s108 = ssub.s32 %s33, %s42
      %s109 = sor.u32 %s107, %s108
      %p110 = scmp.eq.s32.totalorder %s109, 0
      %s112 = sadd.s32 %s111, 1
      %s113 = scalar_select %p110, %s111, %s112
      %p116 = pneg %p110
      %p117 = scmp.eq.s32.totalorder %s24, 1
      %p118 = por %p116, %p117
      %p119 = scmp.ne.s32.totalorder %s111, %s114
      %p120 = scmp.eq.s32.totalorder %s24, 0
      %p121 = por %p119, %p120
      %p122 = scmp.ne.s32.totalorder %s111, %s114
      %p123 = scmp.eq.s32.totalorder %s29, 1
      %p124 = por %p122, %p123
      %p125 = scmp.ne.s32.totalorder %s114, %s115
      %p126 = scmp.eq.s32.totalorder %s29, 0
      %p127 = por %p125, %p126
      %p128 = scmp.ne.s32.totalorder %s114, %s115
      %p129 = scmp.eq.s32.totalorder %s30, 1
      %p130 = por %p128, %p129
      %p132 = scmp.ne.s32.totalorder %s115, %s131
      %p133 = scmp.eq.s32.totalorder %s30, 0
      %p134 = por %p132, %p133
      %s135 = ssub.s32 %s31, %s50
      %s136 = ssub.s32 %s32, %s46
      %s137 = sor.u32 %s135, %s136
      %s138 = ssub.s32 %s33, %s42
      %s139 = sor.u32 %s137, %s138
      %p140 = scmp.eq.s32.totalorder %s139, 0
      %s142 = sadd.s32 %s141, 1
      %s143 = scalar_select %p140, %s141, %s142
      %p146 = pneg %p140
      %p147 = scmp.eq.s32.totalorder %s24, 1
      %p148 = por %p146, %p147
      %p149 = scmp.ne.s32.totalorder %s141, %s144
      %p150 = scmp.eq.s32.totalorder %s24, 0
      %p151 = por %p149, %p150
      %p152 = scmp.ne.s32.totalorder %s141, %s144
      %p153 = scmp.eq.s32.totalorder %s29, 1
      %p154 = por %p152, %p153
      %p155 = scmp.ne.s32.totalorder %s144, %s145
      %p156 = scmp.eq.s32.totalorder %s29, 0
      %p157 = por %p155, %p156
      %p158 = scmp.ne.s32.totalorder %s144, %s145
      %p159 = scmp.eq.s32.totalorder %s30, 1
      %p160 = por %p158, %p159
      %p162 = scmp.ne.s32.totalorder %s145, %s161
      %p163 = scmp.eq.s32.totalorder %s30, 0
      %p164 = por %p162, %p163
      %s165 = ssub.s32 %s31, %s50
      %s166 = ssub.s32 %s32, %s46
      %s167 = sor.u32 %s165, %s166
      %p168 = scmp.eq.s32.totalorder %s167, 0
      %s170 = sadd.s32 %s169, 1
      %s171 = scalar_select %p168, %s169, %s170
      %p174 = pneg %p168
      %p175 = scmp.eq.s32.totalorder %s24, 1
      %p176 = por %p174, %p175
      %p177 = scmp.ne.s32.totalorder %s169, %s172
      %p178 = scmp.eq.s32.totalorder %s24, 0
      %p179 = por %p177, %p178
      %p180 = scmp.ne.s32.totalorder %s169, %s172
      %p181 = scmp.eq.s32.totalorder %s29, 1
      %p182 = por %p180, %p181
      %p183 = scmp.ne.s32.totalorder %s172, %s173
      %p184 = scmp.eq.s32.totalorder %s29, 0
      %p185 = por %p183, %p184
      %p186 = scmp.ne.s32.totalorder %s172, %s173
      %p187 = scmp.eq.s32.totalorder %s30, 1
      %p188 = por %p186, %p187
      %p190 = scmp.ne.s32.totalorder %s173, %s189
      %p191 = scmp.eq.s32.totalorder %s30, 0
      %p192 = por %p190, %p191
      %s193 = ssub.s32 %s31, %s50
      %s194 = ssub.s32 %s32, %s46
      %s195 = sor.u32 %s193, %s194
      %p196 = scmp.eq.s32.totalorder %s195, 0
      %s198 = sadd.s32 %s197, 1
      %s199 = scalar_select %p196, %s197, %s198
      %p202 = pneg %p196
      %p203 = scmp.eq.s32.totalorder %s24, 1
      %p204 = por %p202, %p203
      %p205 = scmp.ne.s32.totalorder %s197, %s200
      %p206 = scmp.eq.s32.totalorder %s24, 0
      %p207 = por %p205, %p206
      %p208 = scmp.ne.s32.totalorder %s197, %s200
      %p209 = scmp.eq.s32.totalorder %s29, 1
      %p210 = por %p208, %p209
      %p211 = scmp.ne.s32.totalorder %s200, %s201
      %p212 = scmp.eq.s32.totalorder %s29, 0
      %p213 = por %p211, %p212
      %p214 = scmp.ne.s32.totalorder %s200, %s201
      %p215 = scmp.eq.s32.totalorder %s30, 1
      %p216 = por %p214, %p215
      %p218 = scmp.ne.s32.totalorder %s201, %s217
      %p219 = scmp.eq.s32.totalorder %s30, 0
      %p220 = por %p218, %p219
      %p221 = scmp.le.s32.totalorder 1, %s24
      %p222 = scmp.lt.s32.totalorder %s24, 3
      %p223 = pnand %p221, %p222
      %p224 = pneg %p223
      // Predicated region
      $region9: #{tpu_custom_call.1} parent=5 // pred_check
        _
      $region10: #{tpu_custom_call.1} parent=5 // pred_check_branch
        %226 = sbr.rel (%p223) target = $region12
      $region11: #{tpu_custom_call.1} parent=5 // pred_region
        %s227 = ssub.s32 %s24, 1
      $region12: #{tpu_custom_call.1} parent=5 // pred_fallthru
        _
      %p228 = scmp.lt.s32.totalorder %s24, 2
      // Predicated region
      $region13: #{tpu_custom_call.1} parent=5 // pred_check
        %p229 = pneg %p228
      $region14: #{tpu_custom_call.1} parent=5 // pred_check_branch
        %231 = sbr.rel (%p229) target = $region16
      $region15: #{tpu_custom_call.1} parent=5 // pred_region
        // Predicated region
        $region17: #{tpu_custom_call.1} parent=15 // pred_check
          %p232 = pneg %p65
        $region18: #{tpu_custom_call.1} parent=15 // pred_check_branch
          %234 = sbr.rel (%p232) target = $region20
        $region19: #{tpu_custom_call.1} parent=15 // pred_region
          %s235 = sand.u32 %s55, 1
          %s236 = scalar_lea.sflag [#allocation3], %s235
          %s237 = sand.u32 %s55, 1
          %s238 = smul.addr %s237, 4
          %s239 = scalar_lea.vmem [#allocation2], %s238
          %s241 = ssub.s32 64, 64
          %242 = vsyncadd %s236, %s241
          %s243 = sadd.s32 %s32, %s31
          %s244 = smul.addr %s243, 64
          %s245 = scalar_lea.hbm %s0, %s244
          %s247 = sshll.u32 %s239, 4
          %s248 = int_to_ptr.vmem [resolvable:$true] %s247
          %250 = dma.hbm_to_vmem [thread:$0]  %s245, 64, %s248, %s236
        $region20: #{tpu_custom_call.1} parent=15 // pred_fallthru
          _
        // Predicated region
        $region21: #{tpu_custom_call.1} parent=15 // pred_check
          %p251 = pneg %p93
        $region22: #{tpu_custom_call.1} parent=15 // pred_check_branch
          %253 = sbr.rel (%p251) target = $region24
        $region23: #{tpu_custom_call.1} parent=15 // pred_region
          %s254 = sand.u32 %s24, 1
          %s255 = scalar_lea.sflag [#allocation6], %s254
          %s256 = sand.u32 %s83, 1
          %s257 = smul.addr %s256, 128
          %s258 = scalar_lea.vmem [#allocation5], %s257
          %s259 = smul.u32 2, %s33
          %s261 = ssub.s32 2048, 2048
          %262 = vsyncadd %s255, %s261
          %s263 = smul.addr %s31, 32
          %s264 = sadd.s32 %s259, %s263
          %s265 = smul.addr %s264, 64
          %s266 = scalar_lea.hbm %s1, %s265
          %s267 = sshll.u32 %s258, 4
          %s268 = int_to_ptr.vmem [resolvable:$true] %s267
          %273 = dma.hbm_to_vmem [thread:$0]  %s266, 2048, %s268, %s255, 128, 128, 8
        $region24: #{tpu_custom_call.1} parent=15 // pred_fallthru
          _
        // Predicated region
        $region25: #{tpu_custom_call.1} parent=15 // pred_check
          %p274 = pneg %p121
        $region26: #{tpu_custom_call.1} parent=15 // pred_check_branch
          %276 = sbr.rel (%p274) target = $region28
        $region27: #{tpu_custom_call.1} parent=15 // pred_region
          %s277 = sand.u32 %s24, 1
          %s278 = scalar_lea.sflag [#allocation6], %s277
          %s279 = sand.u32 %s111, 1
          %s280 = smul.addr %s279, 2
          %s281 = scalar_lea.vmem [#allocation7], %s280
          %s282 = smul.u32 2, %s33
          %s284 = ssub.s32 32, 32
          %285 = vsyncadd %s278, %s284
          %s286 = smul.addr %s31, 2
          %s287 = sadd.s32 %s282, %s286
          %s288 = smul.addr %s287, 16
          %s289 = scalar_lea.hbm %s2, %s288
          %s291 = sshll.u32 %s281, 4
          %s292 = int_to_ptr.vmem [resolvable:$true] %s291
          %294 = dma.hbm_to_vmem [thread:$0]  %s289, 32, %s292, %s278
        $region28: #{tpu_custom_call.1} parent=15 // pred_fallthru
          _
      $region16: #{tpu_custom_call.1} parent=5 // pred_fallthru
        _
      %p295 = scmp.le.s32.totalorder 1, %s24
      %p296 = scmp.lt.s32.totalorder %s24, 3
      %p297 = pnand %p295, %p296
      %p298 = pneg %p297
      // Predicated region
      $region29: #{tpu_custom_call.1} parent=5 // pred_check
        _
      $region30: #{tpu_custom_call.1} parent=5 // pred_check_branch
        %300 = sbr.rel (%p297) target = $region32
      $region31: #{tpu_custom_call.1} parent=5 // pred_region
        %s301 = ssub.s32 %s24, 1
        %s302 = sand.u32 %s58, 1
        %s303 = scalar_lea.sflag [#allocation3], %s302
        %s304 = sand.u32 %s58, 1
        %s305 = smul.addr %s304, 4
        %s306 = scalar_lea.vmem [#allocation2], %s305
        // Predicated region
        $region33: #{tpu_custom_call.1} parent=31 // pred_check
          %p307 = pneg %p71
        $region34: #{tpu_custom_call.1} parent=31 // pred_check_branch
          %309 = sbr.rel (%p307) target = $region36
        $region35: #{tpu_custom_call.1} parent=31 // pred_region
          %310 = dma.done %s303, 64
        $region36: #{tpu_custom_call.1} parent=31 // pred_fallthru
          _
        %s311 = sand.u32 %s29, 1
        %s312 = scalar_lea.sflag [#allocation6], %s311
        %s313 = sand.u32 %s86, 1
        %s314 = smul.addr %s313, 128
        %s315 = scalar_lea.vmem [#allocation5], %s314
        // Predicated region
        $region37: #{tpu_custom_call.1} parent=31 // pred_check
          %p316 = pneg %p99
        $region38: #{tpu_custom_call.1} parent=31 // pred_check_branch
          %318 = sbr.rel (%p316) target = $region40
        $region39: #{tpu_custom_call.1} parent=31 // pred_region
          %319 = dma.done %s312, 2048
        $region40: #{tpu_custom_call.1} parent=31 // pred_fallthru
          _
        %s320 = sand.u32 %s29, 1
        %s321 = scalar_lea.sflag [#allocation6], %s320
        %s322 = sand.u32 %s114, 1
        %s323 = smul.addr %s322, 2
        %s324 = scalar_lea.vmem [#allocation7], %s323
        // Predicated region
        $region41: #{tpu_custom_call.1} parent=31 // pred_check
          %p325 = pneg %p127
        $region42: #{tpu_custom_call.1} parent=31 // pred_check_branch
          %327 = sbr.rel (%p325) target = $region44
        $region43: #{tpu_custom_call.1} parent=31 // pred_region
          %328 = dma.done %s321, 32
        $region44: #{tpu_custom_call.1} parent=31 // pred_fallthru
          _
        %s329 = sand.u32 %s58, 1
        %s330 = scalar_lea.sflag [#allocation3], %s329
        %s331 = sand.u32 %s58, 1
        %s332 = smul.addr %s331, 4
        %s333 = scalar_lea.vmem [#allocation2], %s332
        %p334 = pneg %p71
        %p335 = pneg %p68
        %s336 = sand.u32 %s29, 1
        %s337 = scalar_lea.sflag [#allocation6], %s336
        %s338 = sand.u32 %s86, 1
        %s339 = smul.addr %s338, 128
        %s340 = scalar_lea.vmem [#allocation5], %s339
        %p341 = pneg %p99
        %p342 = pneg %p96
        %s343 = sand.u32 %s29, 1
        %s344 = scalar_lea.sflag [#allocation6], %s343
        %s345 = sand.u32 %s114, 1
        %s346 = smul.addr %s345, 2
        %s347 = scalar_lea.vmem [#allocation7], %s346
        %p348 = pneg %p127
        %p349 = pneg %p124
        %p350 = pneg %p157
        %p351 = pneg %p154
        %s352 = sand.u32 %s144, 1
        %s353 = scalar_lea.sflag [#allocation4], %s352
        %s354 = sand.u32 %s144, 1
        %s355 = smul.addr %s354, 16
        %s356 = scalar_lea.vmem [#allocation8], %s355
        %p357 = pneg %p185
        %p358 = pneg %p182
        %s359 = sand.u32 %s29, 1
        %s360 = scalar_lea.sflag [#allocation10], %s359
        %s361 = sand.u32 %s172, 1
        %s362 = smul.addr %s361, 8
        %s363 = scalar_lea.vmem [#allocation9], %s362
        %p364 = pneg %p213
        %p365 = pneg %p210
        %s366 = sand.u32 %s29, 1
        %s367 = scalar_lea.sflag [#allocation10], %s366
        %s368 = sand.u32 %s200, 1
        %s369 = smul.addr %s368, 8
        %s370 = scalar_lea.vmem [#allocation11], %s369
        %s371 = smul.u32 2, %s36
        %s372 = smul.u32 2, %s36
        %s373 = smul.u32 2, %s36
        %p375 = scmp.eq.s32.totalorder %s36, 0
        // Predicated region
        $region45: #{tpu_custom_call.1} parent=31 // pred_check
          %p376 = pneg %p375
        $region46: #{tpu_custom_call.1} parent=31 // pred_check_branch
          %378 = sbr.rel (%p376) target = $region48
        $region47: #{tpu_custom_call.1} parent=31 // pred_region
          %379 = vst [vmem:[%s363] sm:$0xff] -1e+30
          %380 = vst [vmem:[%s370] sm:$0xff] 0
        $region48: #{tpu_custom_call.1} parent=31 // pred_fallthru
          _
        %v381 = vld [vmem:[%s306] sm:$0xf]
        %v382 = vld [vmem:[%s315] sm:$0xff]
        %v383 = vld [vmem:[%s315 + $0x8] sm:$0xff]
        %v384 = vld [vmem:[%s315 + $0x10] sm:$0xff]
        %v385 = vld [vmem:[%s315 + $0x18] sm:$0xff]
        %v386 = vld [vmem:[%s315 + $0x20] sm:$0xff]
        %v387 = vld [vmem:[%s315 + $0x28] sm:$0xff]
        %v388 = vld [vmem:[%s315 + $0x30] sm:$0xff]
        %v389 = vld [vmem:[%s315 + $0x38] sm:$0xff]
        %v390 = vld [vmem:[%s315 + $0x40] sm:$0xff]
        %v391 = vld [vmem:[%s315 + $0x48] sm:$0xff]
        %v392 = vld [vmem:[%s315 + $0x50] sm:$0xff]
        %v393 = vld [vmem:[%s315 + $0x58] sm:$0xff]
        %v394 = vld [vmem:[%s315 + $0x60] sm:$0xff]
        %v395 = vld [vmem:[%s315 + $0x68] sm:$0xff]
        %v396 = vld [vmem:[%s315 + $0x70] sm:$0xff]
        %v397 = vld [vmem:[%s315 + $0x78] sm:$0xff]
        %v398 = vld [vmem:[%s324] sm:$0x3]
        %v400 = vlaneseq
        %v401 = vshrl.u32 %v400, 7
        %v402 = vsub.s32 0, %v401
        %v403 = vrot.slane %v398, %v402
        %v404 = vlaneseq
        %v405 = vshrl.u32 %v404, 7
        %v406 = vsub.s32 1, %v405
        %v407 = vrot.slane %v398, %v406
        %v426 = vunpack.c.l.b16 %v382
        %v427 = vunpack.c.h.b16 %v382
        %v428 = vunpack.c.l.b16 %v383
        %v429 = vunpack.c.h.b16 %v383
        %v430 = vunpack.c.l.b16 %v384
        %v431 = vunpack.c.h.b16 %v384
        %v432 = vunpack.c.l.b16 %v385
        %v433 = vunpack.c.h.b16 %v385
        %v434 = vunpack.c.l.b16 %v386
        %v435 = vunpack.c.h.b16 %v386
        %v436 = vunpack.c.l.b16 %v387
        %v437 = vunpack.c.h.b16 %v387
        %v438 = vunpack.c.l.b16 %v388
        %v439 = vunpack.c.h.b16 %v388
        %v440 = vunpack.c.l.b16 %v389
        %v441 = vunpack.c.h.b16 %v389
        %v442 = vunpack.c.l.b16 %v390
        %v443 = vunpack.c.h.b16 %v390
        %v444 = vunpack.c.l.b16 %v391
        %v445 = vunpack.c.h.b16 %v391
        %v446 = vunpack.c.l.b16 %v392
        %v447 = vunpack.c.h.b16 %v392
        %v448 = vunpack.c.l.b16 %v393
        %v449 = vunpack.c.h.b16 %v393
        %v450 = vunpack.c.l.b16 %v394
        %v451 = vunpack.c.h.b16 %v394
        %v452 = vunpack.c.l.b16 %v395
        %v453 = vunpack.c.h.b16 %v395
        %v454 = vunpack.c.l.b16 %v396
        %v455 = vunpack.c.h.b16 %v396
        %v456 = vunpack.c.l.b16 %v397
        %v457 = vunpack.c.h.b16 %v397
        %v458 = vpack.c.b16 %v428, %v426
        %v459 = vpack.c.b16 %v429, %v427
        %v460 = vpack.c.b16 %v432, %v430
        %v461 = vpack.c.b16 %v433, %v431
        %v462 = vpack.c.b16 %v436, %v434
        %v463 = vpack.c.b16 %v437, %v435
        %v464 = vpack.c.b16 %v440, %v438
        %v465 = vpack.c.b16 %v441, %v439
        %v466 = vpack.c.b16 %v444, %v442
        %v467 = vpack.c.b16 %v445, %v443
        %v468 = vpack.c.b16 %v448, %v446
        %v469 = vpack.c.b16 %v449, %v447
        %v470 = vpack.c.b16 %v452, %v450
        %v471 = vpack.c.b16 %v453, %v451
        %v472 = vpack.c.b16 %v456, %v454
        %v473 = vpack.c.b16 %v457, %v455
        %490 = vmatprep.subr.bf16.mxu0 %v473
        %491 = vmatpush1.bf16.msra.mxu0 %v472
        %492 = vmatprep.subr.bf16.mxu0 %v471
        %493 = vmatpush1.bf16.msra.mxu0 %v470
        %494 = vmatprep.subr.bf16.mxu0 %v469
        %495 = vmatpush1.bf16.msra.mxu0 %v468
        %496 = vmatprep.subr.bf16.mxu0 %v467
        %497 = vmatpush1.bf16.msra.mxu0 %v466
        %498 = vmatprep.subr.bf16.mxu0 %v465
        %499 = vmatpush1.bf16.msra.mxu0 %v464
        %500 = vmatprep.subr.bf16.mxu0 %v463
        %501 = vmatpush1.bf16.msra.mxu0 %v462
        %502 = vmatprep.subr.bf16.mxu0 %v461
        %503 = vmatpush1.bf16.msra.mxu0 %v460
        %504 = vmatprep.subr.bf16.mxu0 %v459
        %505 = vmatpush1.bf16.msra.mxu0 %v458
        %506 = vmatprep.subr.bf16.mxu0 0
        %507 = vmatpush2.bf16.msra.mxu0 0
        %508 = vmatprep.subr.bf16.mxu0 0
        %509 = vmatpush2.bf16.msra.mxu0 0
        %510 = vmatprep.subr.bf16.mxu0 0
        %511 = vmatpush2.bf16.msra.mxu0 0
        %512 = vmatprep.subr.bf16.mxu0 0
        %513 = vmatpush2.bf16.msra.mxu0 0
        %514 = vmatprep.subr.bf16.mxu0 0
        %515 = vmatpush2.bf16.msra.mxu0 0
        %516 = vmatprep.subr.bf16.mxu0 0
        %517 = vmatpush2.bf16.msra.mxu0 0
        %518 = vmatprep.subr.bf16.mxu0 0
        %519 = vmatpush2.bf16.msra.mxu0 0
        %520 = vmatprep.subr.bf16.mxu0 0
        %521 = vmatpush2.bf16.msra.mxu0 0
        %522 = vmatprep.mubr.bf16.mxu0 0
        %523 = vmatmul.mubr.bf16.gmra.mxu0 %v381
        %v524 = vpop.f32.mrf.mxu0
        %v525 = vadd.f32 %v403, %v524
        %v526 = vpop.f32.mrf.mxu0
        %v527 = vadd.f32 %v407, %v526
        %v528 = vpop.f32.mrf.mxu0
        %v529 = vpop.f32.mrf.mxu0
        %530 = vdwg.mxu0
        %531 = vst [vmem:[%s356] sm:$0xff] %v525
        %532 = vst [vmem:[%s356 + $0x8] sm:$0xff] %v527
        %v533 = vlaneseq
        %v534 = vand.u32 %v533, 127
        %v535 = vadd.s32 %v534, 128
        %s536 = smul.u32 %s36, 256
        %v537 = vstv %s536
        %v538 = vadd.s32 %v534, %v537
        %v539 = vadd.s32 %v535, %v537
        %v540 = vld [vmem:[%s363] sm:$0xff]
        %v541 = vld [vmem:[%s370] sm:$0xff]
        %v542 = vmax.f32 %v525, %v527
        %543 = vmax.xlane.f32.xlu0 %v542
        %v544 = vpop.xlane.xlu0 %543
        %545 = vmax.xlane.f32.xlu0 %v540
        %v546 = vpop.xlane.xlu0 %545
        %v547 = vmax.f32 %v544, %v546
        %vm548 = vcmp.eq.f32.partialorder %v525, %v547
        %vm549 = vcmp.eq.f32.partialorder %v527, %v547
        %vm550 = vcmp.eq.f32.partialorder %v540, %v547
        %v551 = vsel %vm548, %v538, 1073741824
        %v552 = vsel %vm549, %v539, 1073741824
        %vm553 = vcmp.lt.s32.totalorder %v551, %v552
        %v554 = vsel %vm553, %v551, %v552
        %v555 = vand.u32 %v554, 65535
        %v556 = vshra.s32 %v554, 16
        %v557 = vcvt.s32.f32 %v555
        %v558 = vcvt.s32.f32 %v556
        %559 = vmin.xlane.f32.xlu0 %v558
        %v560 = vpop.xlane.xlu0 %559
        %vm561 = vcmp.eq.f32.partialorder %v558, %v560
        %v562 = vsel %vm561, %v557, inf
        %563 = vmin.xlane.f32.xlu0 %v562
        %v564 = vpop.xlane.xlu0 %563
        %v565 = vcvt.f32.s32 %v564
        %v566 = vcvt.f32.s32 %v560
        %v567 = vshll.u32 %v566, 16
        %v568 = vadd.s32 %v567, %v565
        %v569 = vsel %vm550, %v541, 1073741824
        %v570 = vand.u32 %v569, 65535
        %v571 = vshra.s32 %v569, 16
        %v572 = vcvt.s32.f32 %v570
        %v573 = vcvt.s32.f32 %v571
        %574 = vmin.xlane.f32.xlu0 %v573
        %v575 = vpop.xlane.xlu0 %574
        %vm576 = vcmp.eq.f32.partialorder %v573, %v575
        %v577 = vsel %vm576, %v572, inf
        %578 = vmin.xlane.f32.xlu0 %v577
        %v579 = vpop.xlane.xlu0 %578
        %v580 = vcvt.f32.s32 %v579
        %v581 = vcvt.f32.s32 %v575
        %v582 = vshll.u32 %v581, 16
        %v583 = vadd.s32 %v582, %v580
        %vm584 = vcmp.lt.s32.totalorder %v568, %v583
        %v585 = vsel %vm584, %v568, %v583
        %vm586 = vcmp.lt.s32.totalorder %v585, 255
        %v587 = vsel %vm586, %v585, 255
        %vm588 = vcmp.eq.s32.totalorder %v538, %v587
        %vm589 = vcmp.eq.s32.totalorder %v539, %v587
        %vm590 = vmand %vm548, %vm588
        %vm591 = vmand %vm549, %vm589
        %v592 = vsel %vm590, -1e+30, %v525
        %v593 = vsel %vm591, -1e+30, %v527
        %vm594 = vcmp.eq.s32.totalorder %v541, %v587
        %vm595 = vmand %vm550, %vm594
        %v596 = vsel %vm595, -1e+30, %v540
        %vm597 = vcmp.eq.s32.totalorder %v534, 0
        %v598 = vsel %vm597, %v547, -1e+30
        %v599 = vsel %vm597, %v587, 0
        %v600 = vmax.f32 %v592, %v593
        %601 = vmax.xlane.f32.xlu0 %v600
        %v602 = vpop.xlane.xlu0 %601
        %603 = vmax.xlane.f32.xlu0 %v596
        %v604 = vpop.xlane.xlu0 %603
        %v605 = vmax.f32 %v602, %v604
        %vm606 = vcmp.eq.f32.partialorder %v592, %v605
        %vm607 = vcmp.eq.f32.partialorder %v593, %v605
        %vm608 = vcmp.eq.f32.partialorder %v596, %v605
        %v609 = vsel %vm606, %v538, 1073741824
        %v610 = vsel %vm607, %v539, 1073741824
        %vm611 = vcmp.lt.s32.totalorder %v609, %v610
        %v612 = vsel %vm611, %v609, %v610
        %v613 = vand.u32 %v612, 65535
        %v614 = vshra.s32 %v612, 16
        %v615 = vcvt.s32.f32 %v613
        %v616 = vcvt.s32.f32 %v614
        %617 = vmin.xlane.f32.xlu0 %v616
        %v618 = vpop.xlane.xlu0 %617
        %vm619 = vcmp.eq.f32.partialorder %v616, %v618
        %v620 = vsel %vm619, %v615, inf
        %621 = vmin.xlane.f32.xlu0 %v620
        %v622 = vpop.xlane.xlu0 %621
        %v623 = vcvt.f32.s32 %v622
        %v624 = vcvt.f32.s32 %v618
        %v625 = vshll.u32 %v624, 16
        %v626 = vadd.s32 %v625, %v623
        %v627 = vsel %vm608, %v541, 1073741824
        %v628 = vand.u32 %v627, 65535
        %v629 = vshra.s32 %v627, 16
        %v630 = vcvt.s32.f32 %v628
        %v631 = vcvt.s32.f32 %v629
        %632 = vmin.xlane.f32.xlu0 %v631
        %v633 = vpop.xlane.xlu0 %632
        %vm634 = vcmp.eq.f32.partialorder %v631, %v633
        %v635 = vsel %vm634, %v630, inf
        %636 = vmin.xlane.f32.xlu0 %v635
        %v637 = vpop.xlane.xlu0 %636
        %v638 = vcvt.f32.s32 %v637
        %v639 = vcvt.f32.s32 %v633
        %v640 = vshll.u32 %v639, 16
        %v641 = vadd.s32 %v640, %v638
        %vm642 = vcmp.lt.s32.totalorder %v626, %v641
        %v643 = vsel %vm642, %v626, %v641
        %vm644 = vcmp.lt.s32.totalorder %v643, 255
        %v645 = vsel %vm644, %v643, 255
        %vm646 = vcmp.eq.s32.totalorder %v538, %v645
        %vm647 = vcmp.eq.s32.totalorder %v539, %v645
        %vm648 = vmand %vm606, %vm646
        %vm649 = vmand %vm607, %vm647
        %v650 = vsel %vm648, -1e+30, %v592
        %v651 = vsel %vm649, -1e+30, %v593
        %vm652 = vcmp.eq.s32.totalorder %v541, %v645
        %vm653 = vmand %vm608, %vm652
        %v654 = vsel %vm653, -1e+30, %v596
        %vm655 = vcmp.eq.s32.totalorder %v534, 1
        %v656 = vsel %vm655, %v605, %v598
        %v657 = vsel %vm655, %v645, %v599
        %v658 = vmax.f32 %v650, %v651
        %659 = vmax.xlane.f32.xlu0 %v658
        %v660 = vpop.xlane.xlu0 %659
        %661 = vmax.xlane.f32.xlu0 %v654
        %v662 = vpop.xlane.xlu0 %661
        %v663 = vmax.f32 %v660, %v662
        %vm664 = vcmp.eq.f32.partialorder %v650, %v663
        %vm665 = vcmp.eq.f32.partialorder %v651, %v663
        %vm666 = vcmp.eq.f32.partialorder %v654, %v663
        %v667 = vsel %vm664, %v538, 1073741824
        %v668 = vsel %vm665, %v539, 1073741824
        %vm669 = vcmp.lt.s32.totalorder %v667, %v668
        %v670 = vsel %vm669, %v667, %v668
        %v671 = vand.u32 %v670, 65535
        %v672 = vshra.s32 %v670, 16
        %v673 = vcvt.s32.f32 %v671
        %v674 = vcvt.s32.f32 %v672
        %675 = vmin.xlane.f32.xlu0 %v674
        %v676 = vpop.xlane.xlu0 %675
        %vm677 = vcmp.eq.f32.partialorder %v674, %v676
        %v678 = vsel %vm677, %v673, inf
        %679 = vmin.xlane.f32.xlu0 %v678
        %v680 = vpop.xlane.xlu0 %679
        %v681 = vcvt.f32.s32 %v680
        %v682 = vcvt.f32.s32 %v676
        %v683 = vshll.u32 %v682, 16
        %v684 = vadd.s32 %v683, %v681
        %v685 = vsel %vm666, %v541, 1073741824
        %v686 = vand.u32 %v685, 65535
        %v687 = vshra.s32 %v685, 16
        %v688 = vcvt.s32.f32 %v686
        %v689 = vcvt.s32.f32 %v687
        %690 = vmin.xlane.f32.xlu0 %v689
        %v691 = vpop.xlane.xlu0 %690
        %vm692 = vcmp.eq.f32.partialorder %v689, %v691
        %v693 = vsel %vm692, %v688, inf
        %694 = vmin.xlane.f32.xlu0 %v693
        %v695 = vpop.xlane.xlu0 %694
        %v696 = vcvt.f32.s32 %v695
        %v697 = vcvt.f32.s32 %v691
        %v698 = vshll.u32 %v697, 16
        %v699 = vadd.s32 %v698, %v696
        %vm700 = vcmp.lt.s32.totalorder %v684, %v699
        %v701 = vsel %vm700, %v684, %v699
        %vm702 = vcmp.lt.s32.totalorder %v701, 255
        %v703 = vsel %vm702, %v701, 255
        %vm704 = vcmp.eq.s32.totalorder %v538, %v703
        %vm705 = vcmp.eq.s32.totalorder %v539, %v703
        %vm706 = vmand %vm664, %vm704
        %vm707 = vmand %vm665, %vm705
        %v708 = vsel %vm706, -1e+30, %v650
        %v709 = vsel %vm707, -1e+30, %v651
        %vm710 = vcmp.eq.s32.totalorder %v541, %v703
        %vm711 = vmand %vm666, %vm710
        %v712 = vsel %vm711, -1e+30, %v654
        %vm713 = vcmp.eq.s32.totalorder %v534, 2
        %v714 = vsel %vm713, %v663, %v656
        %v715 = vsel %vm713, %v703, %v657
        %v716 = vmax.f32 %v708, %v709
        %717 = vmax.xlane.f32.xlu0 %v716
        %v718 = vpop.xlane.xlu0 %717
        %719 = vmax.xlane.f32.xlu0 %v712
        %v720 = vpop.xlane.xlu0 %719
        %v721 = vmax.f32 %v718, %v720
        %vm722 = vcmp.eq.f32.partialorder %v708, %v721
        %vm723 = vcmp.eq.f32.partialorder %v709, %v721
        %vm724 = vcmp.eq.f32.partialorder %v712, %v721
        %v725 = vsel %vm722, %v538, 1073741824
        %v726 = vsel %vm723, %v539, 1073741824
        %vm727 = vcmp.lt.s32.totalorder %v725, %v726
        %v728 = vsel %vm727, %v725, %v726
        %v729 = vand.u32 %v728, 65535
        %v730 = vshra.s32 %v728, 16
        %v731 = vcvt.s32.f32 %v729
        %v732 = vcvt.s32.f32 %v730
        %733 = vmin.xlane.f32.xlu0 %v732
        %v734 = vpop.xlane.xlu0 %733
        %vm735 = vcmp.eq.f32.partialorder %v732, %v734
        %v736 = vsel %vm735, %v731, inf
        %737 = vmin.xlane.f32.xlu0 %v736
        %v738 = vpop.xlane.xlu0 %737
        %v739 = vcvt.f32.s32 %v738
        %v740 = vcvt.f32.s32 %v734
        %v741 = vshll.u32 %v740, 16
        %v742 = vadd.s32 %v741, %v739
        %v743 = vsel %vm724, %v541, 1073741824
        %v744 = vand.u32 %v743, 65535
        %v745 = vshra.s32 %v743, 16
        %v746 = vcvt.s32.f32 %v744
        %v747 = vcvt.s32.f32 %v745
        %748 = vmin.xlane.f32.xlu0 %v747
        %v749 = vpop.xlane.xlu0 %748
        %vm750 = vcmp.eq.f32.partialorder %v747, %v749
        %v751 = vsel %vm750, %v746, inf
        %752 = vmin.xlane.f32.xlu0 %v751
        %v753 = vpop.xlane.xlu0 %752
        %v754 = vcvt.f32.s32 %v753
        %v755 = vcvt.f32.s32 %v749
        %v756 = vshll.u32 %v755, 16
        %v757 = vadd.s32 %v756, %v754
        %vm758 = vcmp.lt.s32.totalorder %v742, %v757
        %v759 = vsel %vm758, %v742, %v757
        %vm760 = vcmp.lt.s32.totalorder %v759, 255
        %v761 = vsel %vm760, %v759, 255
        %vm762 = vcmp.eq.s32.totalorder %v534, 3
        %v763 = vsel %vm762, %v721, %v714
        %v764 = vsel %vm762, %v761, %v715
        %765 = vst [vmem:[%s363] sm:$0xff] %v763
        %766 = vst [vmem:[%s370] sm:$0xff] %v764
        %s767 = sand.u32 %s144, 1
        %s768 = scalar_lea.sflag [#allocation4], %s767
        %s769 = sand.u32 %s144, 1
        %s770 = smul.addr %s769, 16
        %s771 = scalar_lea.vmem [#allocation8], %s770
        %s772 = sand.u32 %s29, 1
        %s773 = scalar_lea.sflag [#allocation10], %s772
        %s774 = sand.u32 %s172, 1
        %s775 = smul.addr %s774, 8
        %s776 = scalar_lea.vmem [#allocation9], %s775
        %s777 = sand.u32 %s29, 1
        %s778 = scalar_lea.sflag [#allocation10], %s777
        %s779 = sand.u32 %s200, 1
        %s780 = smul.addr %s779, 8
        %s781 = scalar_lea.vmem [#allocation11], %s780
        // Predicated region
        $region49: #{tpu_custom_call.1} parent=31 // pred_check
          %p782 = pneg %p154
        $region50: #{tpu_custom_call.1} parent=31 // pred_check_branch
          %784 = sbr.rel (%p782) target = $region52
        $region51: #{tpu_custom_call.1} parent=31 // pred_region
          %s785 = smul.u32 2, %s36
          %s787 = ssub.s32 256, 256
          %788 = vsyncadd %s768, %s787
          %s789 = smul.addr %s35, 2
          %s790 = sadd.s32 %s785, %s789
          %s791 = smul.addr %s34, 2
          %s792 = sadd.s32 %s790, %s791
          %s793 = smul.addr %s792, 128
          %s794 = scalar_lea.hbm %s3, %s793
          %s796 = sshll.u32 %s771, 4
          %s797 = int_to_ptr.vmem [resolvable:$true] %s796
          %799 = dma.vmem_to_hbm [thread:$0]  %s797, 256, %s794, %s768
        $region52: #{tpu_custom_call.1} parent=31 // pred_fallthru
          _
        // Predicated region
        $region53: #{tpu_custom_call.1} parent=31 // pred_check
          %p800 = pneg %p182
        $region54: #{tpu_custom_call.1} parent=31 // pred_check_branch
          %802 = sbr.rel (%p800) target = $region56
        $region55: #{tpu_custom_call.1} parent=31 // pred_region
          %s804 = ssub.s32 128, 128
          %805 = vsyncadd %s773, %s804
          %s806 = sadd.s32 %s35, %s34
          %s807 = smul.addr %s806, 128
          %s808 = scalar_lea.hbm %s4, %s807
          %s810 = sshll.u32 %s776, 4
          %s811 = int_to_ptr.vmem [resolvable:$true] %s810
          %813 = dma.vmem_to_hbm [thread:$0]  %s811, 128, %s808, %s773
        $region56: #{tpu_custom_call.1} parent=31 // pred_fallthru
          _
        // Predicated region
        $region57: #{tpu_custom_call.1} parent=31 // pred_check
          %p814 = pneg %p210
        $region58: #{tpu_custom_call.1} parent=31 // pred_check_branch
          %816 = sbr.rel (%p814) target = $region60
        $region59: #{tpu_custom_call.1} parent=31 // pred_region
          %s818 = ssub.s32 128, 128
          %819 = vsyncadd %s778, %s818
          %s820 = sadd.s32 %s35, %s34
          %s821 = smul.addr %s820, 128
          %s822 = scalar_lea.hbm %s5, %s821
          %s824 = sshll.u32 %s781, 4
          %s825 = int_to_ptr.vmem [resolvable:$true] %s824
          %827 = dma.vmem_to_hbm [thread:$0]  %s825, 128, %s822, %s778
        $region60: #{tpu_custom_call.1} parent=31 // pred_fallthru
          _
      $region32: #{tpu_custom_call.1} parent=5 // pred_fallthru
        _
      %p828 = scmp.le.s32.totalorder 2, %s24
      // Predicated region
      $region61: #{tpu_custom_call.1} parent=5 // pred_check
        %p829 = pneg %p828
      $region62: #{tpu_custom_call.1} parent=5 // pred_check_branch
        %831 = sbr.rel (%p829) target = $region64
      $region63: #{tpu_custom_call.1} parent=5 // pred_region
        %s832 = ssub.s32 %s24, 2
        // Predicated region
        $region65: #{tpu_custom_call.1} parent=63 // pred_check
          %p833 = pneg %p160
        $region66: #{tpu_custom_call.1} parent=63 // pred_check_branch
          %835 = sbr.rel (%p833) target = $region68
        $region67: #{tpu_custom_call.1} parent=63 // pred_region
          %s836 = sand.u32 %s145, 1
          %s837 = scalar_lea.sflag [#allocation4], %s836
          %s838 = sand.u32 %s145, 1
          %s839 = smul.addr %s838, 16
          %s840 = scalar_lea.vmem [#allocation8], %s839
          %841 = dma.done %s837, 256
        $region68: #{tpu_custom_call.1} parent=63 // pred_fallthru
          _
        // Predicated region
        $region69: #{tpu_custom_call.1} parent=63 // pred_check
          %p842 = pneg %p188
        $region70: #{tpu_custom_call.1} parent=63 // pred_check_branch
          %844 = sbr.rel (%p842) target = $region72
        $region71: #{tpu_custom_call.1} parent=63 // pred_region
          %s845 = sand.u32 %s30, 1
          %s846 = scalar_lea.sflag [#allocation10], %s845
          %s847 = sand.u32 %s173, 1
          %s848 = smul.addr %s847, 8
          %s849 = scalar_lea.vmem [#allocation9], %s848
          %850 = dma.done %s846, 128
        $region72: #{tpu_custom_call.1} parent=63 // pred_fallthru
          _
        // Predicated region
        $region73: #{tpu_custom_call.1} parent=63 // pred_check
          %p851 = pneg %p216
        $region74: #{tpu_custom_call.1} parent=63 // pred_check_branch
          %853 = sbr.rel (%p851) target = $region76
        $region75: #{tpu_custom_call.1} parent=63 // pred_region
          %s854 = sand.u32 %s30, 1
          %s855 = scalar_lea.sflag [#allocation10], %s854
          %s856 = sand.u32 %s201, 1
          %s857 = smul.addr %s856, 8
          %s858 = scalar_lea.vmem [#allocation11], %s857
          %859 = dma.done %s855, 128
        $region76: #{tpu_custom_call.1} parent=63 // pred_fallthru
          _
      $region64: #{tpu_custom_call.1} parent=5 // pred_fallthru
        _
    $region6: #{tpu_custom_call.1} parent=1 // loop_footer
      %s28 = sadd.s32 1, %s24
    $region7: #{tpu_custom_call.1} parent=1 // loop_footer_branch
      %23 = sbr.rel target = $region3
    $region8: #{tpu_custom_call.1} parent=1 // loop_exit
      _
    %860 = vsyncpa [#allocation3], 1
    %s861 = scalar_lea.sflag [#allocation3], 1
    %862 = vsyncpa %s861, 1
    %863 = vsyncpa [#allocation6], 1
    %s864 = scalar_lea.sflag [#allocation6], 1
    %865 = vsyncpa %s864, 1
    %866 = vsyncpa [#allocation4], 1
    %s867 = scalar_lea.sflag [#allocation4], 1
    %868 = vsyncpa %s867, 1
    %869 = vsyncpa [#allocation10], 1
    %s870 = scalar_lea.sflag [#allocation10], 1
    %871 = vsyncpa %s870, 1

</llo_original>
